<compile_context>
chip_gen: v7x
topology: tpu7x:2x2x1
jax: 0.10.0
libtpu: 0.0.40
codegen_flags: <defaults>
</compile_context>

<pallas_src>
import jax
import jax.numpy as jnp
from jax.experimental import pallas as pl
from jax.experimental.pallas import tpu as pltpu

PAD_IDX = 0
EMBED_DIM = 20
SEQ_LEN = 8
BATCH = 2
LINK_NUM = 10
CONV_K = 4
CNN_DIM = 32
BN_EPS = 1e-3

WIDE_SPARSE = [dict(name=f"f{i}", size=8, dim=4) for i in range(10)]  # feature_dim = 40

# Full-array VMEM residency: total weights+activations ~1.3 MiB << every VMEM limit.
_VMEM = pl.BlockSpec(memory_space=pltpu.MemorySpace.VMEM)


# ------------------------------ Pallas kernel -------------------------------

def _wdc_kernel(sparse_ref, mask_ref, wl_ref, bl_ref, wc_ref, bc_ref,
                dense_ref, dw1, db1, dw2, db2, dw3, db3,
                widep_ref, ww1p, ww1c, wb1, ww2, wb2,
                m1wd, m1ww, m1b, m2w, m2b, ow,
                pred_ref):
    """Fully fused WDC forward.

    sparse_ref : (B, L, 63)  CNNAtt feature concat (BN already folded into wl/bl)
    mask_ref   : (B, L)      1.0 = valid link, 0.0 = padding
    wl/bl      : (63, 32) / (1, 32)          linear_link
    wc/bc      : (K*32, 32) / (1, 32)        Conv1d weight, im2col layout [tap*in, out]
    dense_ref  : (B, 47)                     Deep input
    widep_ref  : (B, 96)                     Wide input (sparse 40 + logistic 56)
    pred_ref   : (B, 1)                      output
    """
    B, L, F = sparse_ref.shape
    C = wl_ref.shape[1]
    K = wc_ref.shape[0] // C
    left = (K - 1) // 2                      # PyTorch 'same' for k=4: 1 left / 2 right

    def lin(x, w, b, relu=True):
        y = jnp.dot(x, w[...], preferred_element_type=jnp.float32) + b[...]
        return jnp.maximum(y, 0.0) if relu else y

    # ------------------------- CNN-attention tower --------------------------
    mask = mask_ref[...]                     # (B, L)
    mq = mask[:, :, None]                    # (B, L, 1) query / value mask

    # linear_link: relu((B*L,63) @ (63,32) + b), then value-mask (matches torch order).
    seq = lin(sparse_ref[...].reshape(B * L, F), wl_ref, bl_ref)
    seq = seq.reshape(B, L, C) * mq          # (B, L, C)

    # Conv1d(padding='same', k=4) as a single im2col matmul: depth K*C = 128 lanes.
    padded = jnp.concatenate(
        [jnp.zeros((B, left, C), jnp.float32), seq,
         jnp.zeros((B, K - 1 - left, C), jnp.float32)], axis=1)       # (B, L+K-1, C)
    window = jnp.concatenate([padded[:, j:j + L, :] for j in range(K)], axis=-1)
    conv = lin(window.reshape(B * L, K * C), wc_ref, bc_ref,
               relu=False).reshape(B, L, C)                           # (B, L, C)

    # Luong attention (query = key = value = conv) + additive key mask.
    scores = jnp.einsum("bld,bmd->blm", conv, conv,
                        preferred_element_type=jnp.float32)           # (B, L, L)
    scores = scores + ((mask - 1.0) * 1e9)[:, None, :]
    e = jnp.exp(scores - jnp.max(scores, axis=-1, keepdims=True))
    weights = e / jnp.sum(e, axis=-1, keepdims=True)                  # exact softmax
    attn = jnp.einsum("blm,bmd->bld", weights, conv,
                      preferred_element_type=jnp.float32) * mq        # query mask
    cnn_out = jnp.sum(attn, axis=1)          # (B, C) -- stays in vregs, never hits HBM

    # ------------------------------ Deep tower ------------------------------
    # TODO(synk): Dropout omitted (inference semantics).
    d = lin(dense_ref[...], dw1, db1)
    d = lin(d, dw2, db2)
    d = lin(d, dw3, db3)

    # ------------------------------ Wide tower ------------------------------
    # wide_w1 split: precomputed 96-wide feats + in-kernel 32-wide cnn output.
    w = jnp.maximum(
        jnp.dot(widep_ref[...], ww1p[...], preferred_element_type=jnp.float32)
        + jnp.dot(cnn_out, ww1c[...], preferred_element_type=jnp.float32)
        + wb1[...], 0.0)
    w = lin(w, ww2, wb2)

    # ------------------------------- MLP head -------------------------------
    # concat(deep, wide) @ mlp1 expressed as two half-matmuls (no concat).
    h = jnp.maximum(
        jnp.dot(d, m1wd[...], preferred_element_type=jnp.float32)
        + jnp.dot(w, m1ww[...], preferred_element_type=jnp.float32)
        + m1b[...], 0.0)                                              # (B, 128)
    h = lin(h, m2w, m2b)                                              # (B, 32)
    pred_ref[...] = jnp.dot(h, ow[...], preferred_element_type=jnp.float32)  # (B, 1)


def pallas_wdc(p, sparse, mask, dense, wide_pre):
    B = dense.shape[0]
    args = (sparse, mask,
            p["linear_link_w"], p["linear_link_b"], p["conv_w"], p["conv_b"],
            dense,
            p["deep_w1"], p["deep_b1"], p["deep_w2"], p["deep_b2"],
            p["deep_w3"], p["deep_b3"],
            wide_pre,
            p["wide_w1_pre"], p["wide_w1_cnn"], p["wide_b1"],
            p["wide_w2"], p["wide_b2"],
            p["mlp1_wd"], p["mlp1_ww"], p["mlp1_b"],
            p["mlp2_w"], p["mlp2_b"], p["out_w"])
    return pl.pallas_call(
        _wdc_kernel,
        out_shape=jax.ShapeDtypeStruct((B, 1), jnp.float32),
        in_specs=[_VMEM] * len(args),
        out_specs=_VMEM,
    )(*args)


# ------------------------------- parameters ---------------------------------

def init_params(key):
    ks = iter(jax.random.split(key, 64))

    def rnd(shape, scale=0.05):
        return scale * jax.random.normal(next(ks), shape, dtype=jnp.float32)

    def unif(shape):
        return jax.random.uniform(next(ks), shape, dtype=jnp.float32)

    p = {}
    # CNNAtt embedding tables (gathered in plain JAX; tables are tiny).
    p["link_emb"] = unif((LINK_NUM + 1, EMBED_DIM)).at[PAD_IDX].set(0.0)   # padding_idx=0
    p["sstatus_emb"] = unif((5, EMBED_DIM))
    p["slimit_emb"] = unif((9, EMBED_DIM)).at[PAD_IDX].set(0.0)            # padding_idx=0

    # Eval-mode BatchNorm1d (running stats, PyTorch defaults) folded into linear_link.
    stime_bn = dict(gamma=jnp.ones((1,)), beta=jnp.zeros((1,)),
                    mean=jnp.zeros((1,)), var=jnp.ones((1,)))
    lss_bn = dict(gamma=jnp.ones((2,)), beta=jnp.zeros((2,)),
                  mean=jnp.zeros((2,)), var=jnp.ones((2,)))

    wl = rnd((EMBED_DIM * 3 + 1 + 2, CNN_DIM))           # (63, 32)
    bl = jnp.zeros((1, CNN_DIM), jnp.float32)

    def fold_bn(w, b, rows, bn):
        scale = bn["gamma"] / jnp.sqrt(bn["var"] + BN_EPS)
        shift = bn["beta"] - bn["mean"] * scale
        b = b + jnp.dot(shift, w[rows])                  # uses un-scaled rows
        w = w.at[rows].set(w[rows] * scale[:, None])
        return w, b

    # feature layout: [id_emb 0:20 | stime 20:21 | sstatus_emb 21:41 | len_sSpeed 41:43 | slimit_emb 43:63]
    wl, bl = fold_bn(wl, bl, slice(EMBED_DIM, EMBED_DIM + 1), stime_bn)
    wl, bl = fold_bn(wl, bl, slice(2 * EMBED_DIM + 1, 2 * EMBED_DIM + 3), lss_bn)
    p["linear_link_w"], p["linear_link_b"] = wl, bl

    # Conv1d weight stored im2col-ready: (K*C_in, C_out). A torch checkpoint maps via
    # weight.permute(2, 1, 0).reshape(K*C_in, C_out).
    p["conv_w"] = rnd((CONV_K * CNN_DIM, CNN_DIM))
    p["conv_b"] = jnp.zeros((1, CNN_DIM), jnp.float32)

    # Deep tower 47 -> 256 -> 256 -> 256 (odd contraction dim is fine on the MXU).
    p["deep_w1"], p["deep_b1"] = rnd((47, 256)), jnp.zeros((1, 256), jnp.float32)
    p["deep_w2"], p["deep_b2"] = rnd((256, 256)), jnp.zeros((1, 256), jnp.float32)
    p["deep_w3"], p["deep_b3"] = rnd((256, 256)), jnp.zeros((1, 256), jnp.float32)

    # Wide tower: wide_w1 split into (40 sparse + 56 logistic) and (32 cnn) halves.
    p["wide_emb"] = [unif((f["size"], f["dim"])) for f in WIDE_SPARSE]
    fdim = sum(f["dim"] for f in WIDE_SPARSE)
    p["wide_w1_pre"] = rnd((fdim + 56, 256))             # 96 -> 256
    p["wide_w1_cnn"] = rnd((CNN_DIM, 256))               # 32 -> 256
    p["wide_b1"] = jnp.zeros((1, 256), jnp.float32)
    p["wide_w2"], p["wide_b2"] = rnd((256, 256)), jnp.zeros((1, 256), jnp.float32)

    # Head.
    # TODO(synk): WDC.__init__ declares mlp1 = Linear(544, 128) but the forward only
    # concatenates out_deep(256)+out_wide(256)=512 features; mlp1 is sized for the
    # actual forward graph (512, stored as two 256->128 halves) so the model is runnable.
    p["mlp1_wd"], p["mlp1_ww"] = rnd((256, 128)), rnd((256, 128))
    p["mlp1_b"] = jnp.zeros((1, 128), jnp.float32)
    p["mlp2_w"], p["mlp2_b"] = rnd((128, 32)), jnp.zeros((1, 32), jnp.float32)
    p["out_w"] = rnd((32, 1))                            # output layer has no bias
    return p


# --------------------------------- forward ----------------------------------

def cnnatt_features(p, train_rnn):
    """Builds the 63-wide CNNAtt feature slab + validity mask (BN folded into kernel)."""
    link_id = train_rnn[:, :, 0].astype(jnp.int32)
    stime = train_rnn[:, :, 1:2]
    sstatus = train_rnn[:, :, 2].astype(jnp.int32)
    len_sspeed = train_rnn[:, :, 3:5]
    slimit = train_rnn[:, :, 5].astype(jnp.int32)

    sparse = jnp.concatenate(
        [jnp.take(p["link_emb"], link_id, axis=0),
         stime,
         jnp.take(p["sstatus_emb"], sstatus, axis=0),
         len_sspeed,
         jnp.take(p["slimit_emb"], slimit, axis=0)], axis=-1)        # (B, L, 63)
    mask = (slimit != PAD_IDX).astype(jnp.float32)                   # (B, L)
    return sparse, mask


def wdc_forward(p, data, label):
    (dense, c_dist, c_wd, c_busy, c_slice, c_city,
     c_b2, c_b1, c_day, c_a1, c_a2, logistic, train_rnn) = data
    B = dense.shape[0]

    sparse, mask = cnnatt_features(p, train_rnn)

    categ = [c_dist, c_wd, c_busy, c_slice, c_city, c_b2, c_b1, c_day, c_a1, c_a2]
    wide_pre = jnp.concatenate(
        [jnp.take(w, c, axis=0).reshape(B, -1) for w, c in zip(p["wide_emb"], categ)]
        + [logistic.reshape(B, -1)], axis=1)                         # (B, 96)

    pred = pallas_wdc(p, sparse, mask, dense.reshape(B, -1), wide_pre)   # (B, 1)

    # TODO(synk): MAPE/SMAPE/MY_MAPE_FT/SatsfScore classes are not provided in the
    # reference source; standard definitions are used as placeholders (plain JAX —
    # trivial reductions over a [B,1] tensor, not extra kernel launches).
    eps = 1e-6
    mape = jnp.mean(jnp.abs(pred - label) / (jnp.abs(label) + eps))
    smape = jnp.mean(2.0 * jnp.abs(pred - label) / (jnp.abs(pred) + jnp.abs(label) + eps))
    my_mape = mape
    satsf = jnp.mean((jnp.abs(pred - label) / (jnp.abs(label) + eps) < 0.2).astype(jnp.float32))
    return mape, smape, my_mape, satsf, pred


# ----------------------------------- main ------------------------------------

if __name__ == "__main__":
    key = jax.random.PRNGKey(0)
    kp, kd = jax.random.split(key)
    params = init_params(kp)

    ks = iter(jax.random.split(kd, 32))
    dense = jax.random.normal(next(ks), (BATCH, 47), jnp.float32)
    categs = [jax.random.randint(next(ks), (BATCH,), 0, f["size"]) for f in WIDE_SPARSE]
    logistic = jax.random.normal(next(ks), (BATCH, 56), jnp.float32)

    link_id = jax.random.randint(next(ks), (BATCH, SEQ_LEN, 1), 0, LINK_NUM + 1)
    stime = jax.random.uniform(next(ks), (BATCH, SEQ_LEN, 1))
    sstatus = jax.random.randint(next(ks), (BATCH, SEQ_LEN, 1), 0, 5)
    len_sspeed = jax.random.uniform(next(ks), (BATCH, SEQ_LEN, 2))
    slimit = jax.random.randint(next(ks), (BATCH, SEQ_LEN, 1), 0, 9)
    train_rnn = jnp.concatenate(
        [link_id.astype(jnp.float32), stime, sstatus.astype(jnp.float32),
         len_sspeed, slimit.astype(jnp.float32)], axis=-1)           # (B, L, 6)

    label = jax.random.uniform(next(ks), (BATCH, 1), jnp.float32, minval=1.0, maxval=10.0)

    data = [dense] + categs + [logistic, train_rnn]

    fwd = jax.jit(wdc_forward)
    mape, smape, my_mape, satsf, pred = fwd(params, data, label)
    jax.block_until_ready(pred)
    assert pred.shape == (BATCH, 1)
    print("KERNEL_OK")
</pallas_src>

<mosaic_0001>
module attributes {stable_mosaic.version = 11 : i64} {
  func.func @_wdc_kernel(%arg0: memref<2x8x63xf32, #tpu.memory_space<vmem>>, %arg1: memref<2x8xf32, #tpu.memory_space<vmem>>, %arg2: memref<63x32xf32, #tpu.memory_space<vmem>>, %arg3: memref<1x32xf32, #tpu.memory_space<vmem>>, %arg4: memref<128x32xf32, #tpu.memory_space<vmem>>, %arg5: memref<1x32xf32, #tpu.memory_space<vmem>>, %arg6: memref<2x47xf32, #tpu.memory_space<vmem>>, %arg7: memref<47x256xf32, #tpu.memory_space<vmem>>, %arg8: memref<1x256xf32, #tpu.memory_space<vmem>>, %arg9: memref<256x256xf32, #tpu.memory_space<vmem>>, %arg10: memref<1x256xf32, #tpu.memory_space<vmem>>, %arg11: memref<256x256xf32, #tpu.memory_space<vmem>>, %arg12: memref<1x256xf32, #tpu.memory_space<vmem>>, %arg13: memref<2x96xf32, #tpu.memory_space<vmem>>, %arg14: memref<96x256xf32, #tpu.memory_space<vmem>>, %arg15: memref<32x256xf32, #tpu.memory_space<vmem>>, %arg16: memref<1x256xf32, #tpu.memory_space<vmem>>, %arg17: memref<256x256xf32, #tpu.memory_space<vmem>>, %arg18: memref<1x256xf32, #tpu.memory_space<vmem>>, %arg19: memref<256x128xf32, #tpu.memory_space<vmem>>, %arg20: memref<256x128xf32, #tpu.memory_space<vmem>>, %arg21: memref<1x128xf32, #tpu.memory_space<vmem>>, %arg22: memref<128x32xf32, #tpu.memory_space<vmem>>, %arg23: memref<1x32xf32, #tpu.memory_space<vmem>>, %arg24: memref<32x1xf32, #tpu.memory_space<vmem>>, %arg25: memref<2x1xf32, #tpu.memory_space<vmem>>) attributes {dimension_semantics = [], scalar_prefetch = 0 : i64, scratch_operands = 0 : i64, tpu.core_type = #tpu.core_type<tc>} {
    %c0 = arith.constant 0 : index
    %c0_0 = arith.constant 0 : index
    %0 = vector.load %arg1[%c0, %c0_0] : memref<2x8xf32, #tpu.memory_space<vmem>>, vector<2x8xf32>
    %1 = vector.shape_cast %0 : vector<2x8xf32> to vector<2x8x1xf32>
    %c0_1 = arith.constant 0 : index
    %c0_2 = arith.constant 0 : index
    %c0_3 = arith.constant 0 : index
    %2 = vector.load %arg0[%c0_1, %c0_2, %c0_3] : memref<2x8x63xf32, #tpu.memory_space<vmem>>, vector<2x8x63xf32>
    %3 = vector.shape_cast %2 : vector<2x8x63xf32> to vector<16x63xf32>
    %c0_4 = arith.constant 0 : index
    %c0_5 = arith.constant 0 : index
    %4 = vector.load %arg2[%c0_4, %c0_5] : memref<63x32xf32, #tpu.memory_space<vmem>>, vector<63x32xf32>
    %cst = arith.constant dense<0.000000e+00> : vector<16x32xf32>
    %5 = tpu.matmul %3, %4, %cst {dimension_numbers = #tpu.dot_dimension_numbers<[1], [0], [0], [1], [0, 0, 1, 1], [], []>} : vector<16x63xf32>, vector<63x32xf32>, vector<16x32xf32> -> vector<16x32xf32>
    %c0_6 = arith.constant 0 : index
    %c0_7 = arith.constant 0 : index
    %6 = vector.load %arg3[%c0_6, %c0_7] : memref<1x32xf32, #tpu.memory_space<vmem>>, vector<1x32xf32>
    %7 = vector.broadcast %6 : vector<1x32xf32> to vector<16x32xf32>
    %8 = arith.addf %5, %7 : vector<16x32xf32>
    %cst_8 = arith.constant 0.000000e+00 : f32
    %9 = vector.broadcast %cst_8 : f32 to vector<16x32xf32>
    %10 = arith.maximumf %8, %9 : vector<16x32xf32>
    %11 = vector.shape_cast %10 : vector<16x32xf32> to vector<2x8x32xf32>
    %12 = vector.broadcast %1 : vector<2x8x1xf32> to vector<2x8x32xf32>
    %13 = arith.mulf %11, %12 : vector<2x8x32xf32>
    %cst_9 = arith.constant 0.000000e+00 : f32
    %14 = vector.broadcast %cst_9 : f32 to vector<2x1x32xf32>
    %cst_10 = arith.constant 0.000000e+00 : f32
    %15 = vector.broadcast %cst_10 : f32 to vector<2x2x32xf32>
    %16 = tpu.concatenate %14, %13, %15 in 1 : vector<2x1x32xf32>, vector<2x8x32xf32>, vector<2x2x32xf32> -> vector<2x11x32xf32>
    %17 = vector.extract_strided_slice %16 {offsets = [0, 0, 0], sizes = [2, 8, 32], strides = [1, 1, 1]} : vector<2x11x32xf32> to vector<2x8x32xf32>
    %18 = vector.extract_strided_slice %16 {offsets = [0, 1, 0], sizes = [2, 8, 32], strides = [1, 1, 1]} : vector<2x11x32xf32> to vector<2x8x32xf32>
    %19 = vector.extract_strided_slice %16 {offsets = [0, 2, 0], sizes = [2, 8, 32], strides = [1, 1, 1]} : vector<2x11x32xf32> to vector<2x8x32xf32>
    %20 = vector.extract_strided_slice %16 {offsets = [0, 3, 0], sizes = [2, 8, 32], strides = [1, 1, 1]} : vector<2x11x32xf32> to vector<2x8x32xf32>
    %21 = tpu.concatenate %17, %18, %19, %20 in 2 : vector<2x8x32xf32>, vector<2x8x32xf32>, vector<2x8x32xf32>, vector<2x8x32xf32> -> vector<2x8x128xf32>
    %22 = vector.shape_cast %21 : vector<2x8x128xf32> to vector<16x128xf32>
    %c0_11 = arith.constant 0 : index
    %c0_12 = arith.constant 0 : index
    %23 = vector.load %arg4[%c0_11, %c0_12] : memref<128x32xf32, #tpu.memory_space<vmem>>, vector<128x32xf32>
    %cst_13 = arith.constant dense<0.000000e+00> : vector<16x32xf32>
    %24 = tpu.matmul %22, %23, %cst_13 {dimension_numbers = #tpu.dot_dimension_numbers<[1], [0], [0], [1], [0, 0, 1, 1], [], []>} : vector<16x128xf32>, vector<128x32xf32>, vector<16x32xf32> -> vector<16x32xf32>
    %c0_14 = arith.constant 0 : index
    %c0_15 = arith.constant 0 : index
    %25 = vector.load %arg5[%c0_14, %c0_15] : memref<1x32xf32, #tpu.memory_space<vmem>>, vector<1x32xf32>
    %26 = vector.broadcast %25 : vector<1x32xf32> to vector<16x32xf32>
    %27 = arith.addf %24, %26 : vector<16x32xf32>
    %28 = vector.shape_cast %27 : vector<16x32xf32> to vector<2x8x32xf32>
    "tpu.trace_start"() <{level = 10 : i32, message = "bld,bmd->blm"}> : () -> ()
    %cst_16 = arith.constant dense<0.000000e+00> : vector<2x8x8xf32>
    %29 = tpu.matmul %28, %28, %cst_16 {dimension_numbers = #tpu.dot_dimension_numbers<[2], [2], [1], [1], [0, 0, 0, 1, 1, 1], [0], [0]>} : vector<2x8x32xf32>, vector<2x8x32xf32>, vector<2x8x8xf32> -> vector<2x8x8xf32>
    "tpu.trace_stop"() : () -> ()
    %cst_17 = arith.constant 1.000000e+00 : f32
    %30 = vector.broadcast %cst_17 : f32 to vector<2x8xf32>
    %31 = arith.subf %0, %30 : vector<2x8xf32>
    %cst_18 = arith.constant 1.000000e+09 : f32
    %32 = vector.broadcast %cst_18 : f32 to vector<2x8xf32>
    %33 = arith.mulf %31, %32 : vector<2x8xf32>
    %34 = vector.shape_cast %33 : vector<2x8xf32> to vector<2x1x8xf32>
    %35 = vector.broadcast %34 : vector<2x1x8xf32> to vector<2x8x8xf32>
    %36 = arith.addf %29, %35 : vector<2x8x8xf32>
    %cst_19 = arith.constant dense<0xFF800000> : vector<2x8xf32>
    %37 = vector.multi_reduction <maximumf>, %36, %cst_19 [2] : vector<2x8x8xf32> to vector<2x8xf32>
    %38 = vector.shape_cast %37 : vector<2x8xf32> to vector<2x8x1xf32>
    %39 = vector.broadcast %38 : vector<2x8x1xf32> to vector<2x8x8xf32>
    %40 = arith.subf %36, %39 : vector<2x8x8xf32>
    %41 = math.exp %40 : vector<2x8x8xf32>
    %cst_20 = arith.constant dense<0.000000e+00> : vector<2x8xf32>
    %42 = vector.multi_reduction <add>, %41, %cst_20 [2] : vector<2x8x8xf32> to vector<2x8xf32>
    %43 = vector.shape_cast %42 : vector<2x8xf32> to vector<2x8x1xf32>
    %44 = vector.broadcast %43 : vector<2x8x1xf32> to vector<2x8x8xf32>
    %45 = arith.divf %41, %44 : vector<2x8x8xf32>
    "tpu.trace_start"() <{level = 10 : i32, message = "blm,bmd->bld"}> : () -> ()
    %cst_21 = arith.constant dense<0.000000e+00> : vector<2x8x32xf32>
    %46 = tpu.matmul %45, %28, %cst_21 {dimension_numbers = #tpu.dot_dimension_numbers<[2], [1], [1], [2], [0, 0, 0, 1, 1, 2], [0], [0]>} : vector<2x8x8xf32>, vector<2x8x32xf32>, vector<2x8x32xf32> -> vector<2x8x32xf32>
    "tpu.trace_stop"() : () -> ()
    %47 = vector.broadcast %1 : vector<2x8x1xf32> to vector<2x8x32xf32>
    %48 = arith.mulf %46, %47 : vector<2x8x32xf32>
    %cst_22 = arith.constant dense<0.000000e+00> : vector<2x32xf32>
    %49 = vector.multi_reduction <add>, %48, %cst_22 [1] : vector<2x8x32xf32> to vector<2x32xf32>
    %c0_23 = arith.constant 0 : index
    %c0_24 = arith.constant 0 : index
    %50 = vector.load %arg6[%c0_23, %c0_24] : memref<2x47xf32, #tpu.memory_space<vmem>>, vector<2x47xf32>
    %c0_25 = arith.constant 0 : index
    %c0_26 = arith.constant 0 : index
    %51 = vector.load %arg7[%c0_25, %c0_26] : memref<47x256xf32, #tpu.memory_space<vmem>>, vector<47x256xf32>
    %cst_27 = arith.constant dense<0.000000e+00> : vector<2x256xf32>
    %52 = tpu.matmul %50, %51, %cst_27 {dimension_numbers = #tpu.dot_dimension_numbers<[1], [0], [0], [1], [0, 0, 1, 1], [], []>} : vector<2x47xf32>, vector<47x256xf32>, vector<2x256xf32> -> vector<2x256xf32>
    %c0_28 = arith.constant 0 : index
    %c0_29 = arith.constant 0 : index
    %53 = vector.load %arg8[%c0_28, %c0_29] : memref<1x256xf32, #tpu.memory_space<vmem>>, vector<1x256xf32>
    %54 = vector.broadcast %53 : vector<1x256xf32> to vector<2x256xf32>
    %55 = arith.addf %52, %54 : vector<2x256xf32>
    %cst_30 = arith.constant 0.000000e+00 : f32
    %56 = vector.broadcast %cst_30 : f32 to vector<2x256xf32>
    %57 = arith.maximumf %55, %56 : vector<2x256xf32>
    %c0_31 = arith.constant 0 : index
    %c0_32 = arith.constant 0 : index
    %58 = vector.load %arg9[%c0_31, %c0_32] : memref<256x256xf32, #tpu.memory_space<vmem>>, vector<256x256xf32>
    %cst_33 = arith.constant dense<0.000000e+00> : vector<2x256xf32>
    %59 = tpu.matmul %57, %58, %cst_33 {dimension_numbers = #tpu.dot_dimension_numbers<[1], [0], [0], [1], [0, 0, 1, 1], [], []>} : vector<2x256xf32>, vector<256x256xf32>, vector<2x256xf32> -> vector<2x256xf32>
    %c0_34 = arith.constant 0 : index
    %c0_35 = arith.constant 0 : index
    %60 = vector.load %arg10[%c0_34, %c0_35] : memref<1x256xf32, #tpu.memory_space<vmem>>, vector<1x256xf32>
    %61 = vector.broadcast %60 : vector<1x256xf32> to vector<2x256xf32>
    %62 = arith.addf %59, %61 : vector<2x256xf32>
    %cst_36 = arith.constant 0.000000e+00 : f32
    %63 = vector.broadcast %cst_36 : f32 to vector<2x256xf32>
    %64 = arith.maximumf %62, %63 : vector<2x256xf32>
    %c0_37 = arith.constant 0 : index
    %c0_38 = arith.constant 0 : index
    %65 = vector.load %arg11[%c0_37, %c0_38] : memref<256x256xf32, #tpu.memory_space<vmem>>, vector<256x256xf32>
    %cst_39 = arith.constant dense<0.000000e+00> : vector<2x256xf32>
    %66 = tpu.matmul %64, %65, %cst_39 {dimension_numbers = #tpu.dot_dimension_numbers<[1], [0], [0], [1], [0, 0, 1, 1], [], []>} : vector<2x256xf32>, vector<256x256xf32>, vector<2x256xf32> -> vector<2x256xf32>
    %c0_40 = arith.constant 0 : index
    %c0_41 = arith.constant 0 : index
    %67 = vector.load %arg12[%c0_40, %c0_41] : memref<1x256xf32, #tpu.memory_space<vmem>>, vector<1x256xf32>
    %68 = vector.broadcast %67 : vector<1x256xf32> to vector<2x256xf32>
    %69 = arith.addf %66, %68 : vector<2x256xf32>
    %cst_42 = arith.constant 0.000000e+00 : f32
    %70 = vector.broadcast %cst_42 : f32 to vector<2x256xf32>
    %71 = arith.maximumf %69, %70 : vector<2x256xf32>
    %c0_43 = arith.constant 0 : index
    %c0_44 = arith.constant 0 : index
    %72 = vector.load %arg13[%c0_43, %c0_44] : memref<2x96xf32, #tpu.memory_space<vmem>>, vector<2x96xf32>
    %c0_45 = arith.constant 0 : index
    %c0_46 = arith.constant 0 : index
    %73 = vector.load %arg14[%c0_45, %c0_46] : memref<96x256xf32, #tpu.memory_space<vmem>>, vector<96x256xf32>
    %cst_47 = arith.constant dense<0.000000e+00> : vector<2x256xf32>
    %74 = tpu.matmul %72, %73, %cst_47 {dimension_numbers = #tpu.dot_dimension_numbers<[1], [0], [0], [1], [0, 0, 1, 1], [], []>} : vector<2x96xf32>, vector<96x256xf32>, vector<2x256xf32> -> vector<2x256xf32>
    %c0_48 = arith.constant 0 : index
    %c0_49 = arith.constant 0 : index
    %75 = vector.load %arg15[%c0_48, %c0_49] : memref<32x256xf32, #tpu.memory_space<vmem>>, vector<32x256xf32>
    %cst_50 = arith.constant dense<0.000000e+00> : vector<2x256xf32>
    %76 = tpu.matmul %49, %75, %cst_50 {dimension_numbers = #tpu.dot_dimension_numbers<[1], [0], [0], [1], [0, 0, 1, 1], [], []>} : vector<2x32xf32>, vector<32x256xf32>, vector<2x256xf32> -> vector<2x256xf32>
    %77 = arith.addf %74, %76 : vector<2x256xf32>
    %c0_51 = arith.constant 0 : index
    %c0_52 = arith.constant 0 : index
    %78 = vector.load %arg16[%c0_51, %c0_52] : memref<1x256xf32, #tpu.memory_space<vmem>>, vector<1x256xf32>
    %79 = vector.broadcast %78 : vector<1x256xf32> to vector<2x256xf32>
    %80 = arith.addf %77, %79 : vector<2x256xf32>
    %cst_53 = arith.constant 0.000000e+00 : f32
    %81 = vector.broadcast %cst_53 : f32 to vector<2x256xf32>
    %82 = arith.maximumf %80, %81 : vector<2x256xf32>
    %c0_54 = arith.constant 0 : index
    %c0_55 = arith.constant 0 : index
    %83 = vector.load %arg17[%c0_54, %c0_55] : memref<256x256xf32, #tpu.memory_space<vmem>>, vector<256x256xf32>
    %cst_56 = arith.constant dense<0.000000e+00> : vector<2x256xf32>
    %84 = tpu.matmul %82, %83, %cst_56 {dimension_numbers = #tpu.dot_dimension_numbers<[1], [0], [0], [1], [0, 0, 1, 1], [], []>} : vector<2x256xf32>, vector<256x256xf32>, vector<2x256xf32> -> vector<2x256xf32>
    %c0_57 = arith.constant 0 : index
    %c0_58 = arith.constant 0 : index
    %85 = vector.load %arg18[%c0_57, %c0_58] : memref<1x256xf32, #tpu.memory_space<vmem>>, vector<1x256xf32>
    %86 = vector.broadcast %85 : vector<1x256xf32> to vector<2x256xf32>
    %87 = arith.addf %84, %86 : vector<2x256xf32>
    %cst_59 = arith.constant 0.000000e+00 : f32
    %88 = vector.broadcast %cst_59 : f32 to vector<2x256xf32>
    %89 = arith.maximumf %87, %88 : vector<2x256xf32>
    %c0_60 = arith.constant 0 : index
    %c0_61 = arith.constant 0 : index
    %90 = vector.load %arg19[%c0_60, %c0_61] : memref<256x128xf32, #tpu.memory_space<vmem>>, vector<256x128xf32>
    %cst_62 = arith.constant dense<0.000000e+00> : vector<2x128xf32>
    %91 = tpu.matmul %71, %90, %cst_62 {dimension_numbers = #tpu.dot_dimension_numbers<[1], [0], [0], [1], [0, 0, 1, 1], [], []>} : vector<2x256xf32>, vector<256x128xf32>, vector<2x128xf32> -> vector<2x128xf32>
    %c0_63 = arith.constant 0 : index
    %c0_64 = arith.constant 0 : index
    %92 = vector.load %arg20[%c0_63, %c0_64] : memref<256x128xf32, #tpu.memory_space<vmem>>, vector<256x128xf32>
    %cst_65 = arith.constant dense<0.000000e+00> : vector<2x128xf32>
    %93 = tpu.matmul %89, %92, %cst_65 {dimension_numbers = #tpu.dot_dimension_numbers<[1], [0], [0], [1], [0, 0, 1, 1], [], []>} : vector<2x256xf32>, vector<256x128xf32>, vector<2x128xf32> -> vector<2x128xf32>
    %94 = arith.addf %91, %93 : vector<2x128xf32>
    %c0_66 = arith.constant 0 : index
    %c0_67 = arith.constant 0 : index
    %95 = vector.load %arg21[%c0_66, %c0_67] : memref<1x128xf32, #tpu.memory_space<vmem>>, vector<1x128xf32>
    %96 = vector.broadcast %95 : vector<1x128xf32> to vector<2x128xf32>
    %97 = arith.addf %94, %96 : vector<2x128xf32>
    %cst_68 = arith.constant 0.000000e+00 : f32
    %98 = vector.broadcast %cst_68 : f32 to vector<2x128xf32>
    %99 = arith.maximumf %97, %98 : vector<2x128xf32>
    %c0_69 = arith.constant 0 : index
    %c0_70 = arith.constant 0 : index
    %100 = vector.load %arg22[%c0_69, %c0_70] : memref<128x32xf32, #tpu.memory_space<vmem>>, vector<128x32xf32>
    %cst_71 = arith.constant dense<0.000000e+00> : vector<2x32xf32>
    %101 = tpu.matmul %99, %100, %cst_71 {dimension_numbers = #tpu.dot_dimension_numbers<[1], [0], [0], [1], [0, 0, 1, 1], [], []>} : vector<2x128xf32>, vector<128x32xf32>, vector<2x32xf32> -> vector<2x32xf32>
    %c0_72 = arith.constant 0 : index
    %c0_73 = arith.constant 0 : index
    %102 = vector.load %arg23[%c0_72, %c0_73] : memref<1x32xf32, #tpu.memory_space<vmem>>, vector<1x32xf32>
    %103 = vector.broadcast %102 : vector<1x32xf32> to vector<2x32xf32>
    %104 = arith.addf %101, %103 : vector<2x32xf32>
    %cst_74 = arith.constant 0.000000e+00 : f32
    %105 = vector.broadcast %cst_74 : f32 to vector<2x32xf32>
    %106 = arith.maximumf %104, %105 : vector<2x32xf32>
    %c0_75 = arith.constant 0 : index
    %c0_76 = arith.constant 0 : index
    %107 = vector.load %arg24[%c0_75, %c0_76] : memref<32x1xf32, #tpu.memory_space<vmem>>, vector<32x1xf32>
    %cst_77 = arith.constant dense<0.000000e+00> : vector<2x1xf32>
    %108 = tpu.matmul %106, %107, %cst_77 {dimension_numbers = #tpu.dot_dimension_numbers<[1], [0], [0], [1], [0, 0, 1, 1], [], []>} : vector<2x32xf32>, vector<32x1xf32>, vector<2x1xf32> -> vector<2x1xf32>
    %c0_78 = arith.constant 0 : index
    %c0_79 = arith.constant 0 : index
    %109 = vector.load %arg25[%c0_78, %c0_79] : memref<2x1xf32, #tpu.memory_space<vmem>>, vector<2x1xf32>
    tpu.vector_store %arg25[%c0_78, %c0_79], %108 {strides = array<i32>} : memref<2x1xf32, #tpu.memory_space<vmem>>, vector<2x1xf32>,
    return
  }
}

</mosaic_0001>

<llo_original>
// kernel: wdc_forward.1
$region0: #{wdc_forward.1}
  #allocation0 [shape = 'u32[]', space=smem, size = 0x4, offset = 0x4, fixed_abs, tag = 'smem constant byte address 0x4 - core index']
  #allocation1 [shape = 'u32[144,128]{1,0:T(1,128)}', space=vmem, size = 0x12000, scoped, tag = 'internal scratch']
  %s0 = inlined_call_operand.vmem [shape: f32[2,8,63], index: 0, kind: input, shape index: {}]
  %s1 = inlined_call_operand.vmem [shape: f32[2,8], index: 1, kind: input, shape index: {}]
  %s2 = inlined_call_operand.vmem [shape: f32[63,32], index: 2, kind: input, shape index: {}]
  %s3 = inlined_call_operand.vmem [shape: f32[1,32], index: 3, kind: input, shape index: {}]
  %s4 = inlined_call_operand.vmem [shape: f32[128,32], index: 4, kind: input, shape index: {}]
  %s5 = inlined_call_operand.hbm [shape: f32[1,32], index: 5, kind: input, shape index: {}]
  %s6 = inlined_call_operand.hbm [shape: f32[2,47], index: 6, kind: input, shape index: {}]
  %s7 = inlined_call_operand.vmem [shape: f32[47,256], index: 7, kind: input, shape index: {}]
  %s8 = inlined_call_operand.hbm [shape: f32[1,256], index: 8, kind: input, shape index: {}]
  %s9 = inlined_call_operand.vmem [shape: f32[256,256], index: 9, kind: input, shape index: {}]
  %s10 = inlined_call_operand.hbm [shape: f32[1,256], index: 10, kind: input, shape index: {}]
  %s11 = inlined_call_operand.vmem [shape: f32[256,256], index: 11, kind: input, shape index: {}]
  %s12 = inlined_call_operand.hbm [shape: f32[1,256], index: 12, kind: input, shape index: {}]
  %s13 = inlined_call_operand.vmem [shape: f32[2,96], index: 13, kind: input, shape index: {}]
  %s14 = inlined_call_operand.hbm [shape: f32[96,256], index: 14, kind: input, shape index: {}]
  %s15 = inlined_call_operand.vmem [shape: f32[32,256], index: 15, kind: input, shape index: {}]
  %s16 = inlined_call_operand.hbm [shape: f32[1,256], index: 16, kind: input, shape index: {}]
  %s17 = inlined_call_operand.hbm [shape: f32[256,256], index: 17, kind: input, shape index: {}]
  %s18 = inlined_call_operand.hbm [shape: f32[1,256], index: 18, kind: input, shape index: {}]
  %s19 = inlined_call_operand.vmem [shape: f32[256,128], index: 19, kind: input, shape index: {}]
  %s20 = inlined_call_operand.vmem [shape: f32[256,128], index: 20, kind: input, shape index: {}]
  %s21 = inlined_call_operand.hbm [shape: f32[1,128], index: 21, kind: input, shape index: {}]
  %s22 = inlined_call_operand.vmem [shape: f32[128,32], index: 22, kind: input, shape index: {}]
  %s23 = inlined_call_operand.hbm [shape: f32[1,32], index: 23, kind: input, shape index: {}]
  %s24 = inlined_call_operand.vmem [shape: f32[32,1], index: 24, kind: input, shape index: {}]
  %s25 = inlined_call_operand.vmem [shape: f32[2,1], index: 25, kind: output, shape index: {}]
  %s26 = sld [smem:[#allocation0]]
  $region154: #{wdc_forward.1} parent=0
    _
  %s28 = ssub.s32 1, %s26
  %s29 = scalar_select 0, %s28, %s26
  $region1: #{wdc_forward.1} parent=0
    #allocation2 [shape = 'u8[512]{0}', space=vmem, size = 0x400, scoped, tag = 'input window, operand 5, single buffered']
    #allocation3 [shape = 's32[1]{0}', space=sflag, size = 0x4, scoped, tag = 'scoped memory for wdc_forward.1']
    #allocation4 [shape = 'u8[1024]{0}', space=vmem, size = 0x400, scoped, tag = 'input window, operand 6, single buffered']
    #allocation5 [shape = 's32[1]{0}', space=sflag, size = 0x4, scoped, tag = 'scoped memory for wdc_forward.1']
    #allocation6 [shape = 'u8[1024]{0}', space=vmem, size = 0x400, scoped, tag = 'input window, operand 8, single buffered']
    #allocation7 [shape = 'u8[1024]{0}', space=vmem, size = 0x400, scoped, tag = 'input window, operand 10, single buffered']
    #allocation8 [shape = 's32[1]{0}', space=sflag, size = 0x4, scoped, tag = 'scoped memory for wdc_forward.1']
    #allocation9 [shape = 'u8[1024]{0}', space=vmem, size = 0x400, scoped, tag = 'input window, operand 12, single buffered']
    #allocation10 [shape = 'u8[98304]{0}', space=vmem, size = 0x18000, scoped, tag = 'input window, operand 14, single buffered']
    #allocation11 [shape = 's32[1]{0}', space=sflag, size = 0x4, scoped, tag = 'scoped memory for wdc_forward.1']
    #allocation12 [shape = 'u8[1024]{0}', space=vmem, size = 0x400, scoped, tag = 'input window, operand 16, single buffered']
    #allocation13 [shape = 'u8[262144]{0}', space=vmem, size = 0x40000, scoped, tag = 'input window, operand 17, single buffered']
    #allocation14 [shape = 's32[1]{0}', space=sflag, size = 0x4, scoped, tag = 'scoped memory for wdc_forward.1']
    #allocation15 [shape = 'u8[1024]{0}', space=vmem, size = 0x400, scoped, tag = 'input window, operand 18, single buffered']
    #allocation16 [shape = 'u8[512]{0}', space=vmem, size = 0x400, scoped, tag = 'input window, operand 21, single buffered']
    #allocation17 [shape = 's32[1]{0}', space=sflag, size = 0x4, scoped, tag = 'scoped memory for wdc_forward.1']
    #allocation18 [shape = 'u8[512]{0}', space=vmem, size = 0x400, scoped, tag = 'input window, operand 23, single buffered']
    %30 = vsyncpa [#allocation3], 0
    %31 = vsyncpa [#allocation5], 0
    %32 = vsyncpa [#allocation8], 0
    %33 = vsyncpa [#allocation11], 0
    %34 = vsyncpa [#allocation14], 0
    %35 = vsyncpa [#allocation17], 0
    // Predicated region
    $region2: #{wdc_forward.1} parent=1 // pred_check
      _
    $region3: #{wdc_forward.1} parent=1 // pred_check_branch
      %37 = sbr.rel (0) target = $region5
    $region4: #{wdc_forward.1} parent=1 // pred_region
      _
    $region5: #{wdc_forward.1} parent=1 // pred_fallthru
      _
    // Predicated region
    $region6: #{wdc_forward.1} parent=1 // pred_check
      _
    $region7: #{wdc_forward.1} parent=1 // pred_check_branch
      %39 = sbr.rel (0) target = $region9
    $region8: #{wdc_forward.1} parent=1 // pred_region
      _
    $region9: #{wdc_forward.1} parent=1 // pred_fallthru
      _
    // Predicated region
    $region10: #{wdc_forward.1} parent=1 // pred_check
      _
    $region11: #{wdc_forward.1} parent=1 // pred_check_branch
      %41 = sbr.rel (0) target = $region13
    $region12: #{wdc_forward.1} parent=1 // pred_region
      _
    $region13: #{wdc_forward.1} parent=1 // pred_fallthru
      _
    // Predicated region
    $region14: #{wdc_forward.1} parent=1 // pred_check
      _
    $region15: #{wdc_forward.1} parent=1 // pred_check_branch
      %43 = sbr.rel (0) target = $region17
    $region16: #{wdc_forward.1} parent=1 // pred_region
      _
    $region17: #{wdc_forward.1} parent=1 // pred_fallthru
      _
    // Predicated region
    $region18: #{wdc_forward.1} parent=1 // pred_check
      _
    $region19: #{wdc_forward.1} parent=1 // pred_check_branch
      %45 = sbr.rel (0) target = $region21
    $region20: #{wdc_forward.1} parent=1 // pred_region
      _
    $region21: #{wdc_forward.1} parent=1 // pred_fallthru
      _
    // Predicated region
    $region22: #{wdc_forward.1} parent=1 // pred_check
      _
    $region23: #{wdc_forward.1} parent=1 // pred_check_branch
      %47 = sbr.rel (0) target = $region25
    $region24: #{wdc_forward.1} parent=1 // pred_region
      %s49 = ssub.s32 16, 16
      %50 = vsyncadd [#allocation3], %s49
      %s52 = sshll.u32 [#allocation2], 4
      %s53 = int_to_ptr.vmem [resolvable:$true] %s52
      %55 = dma.hbm_to_vmem [thread:$0]  %s5, 16, %s53, [#allocation3]
    $region25: #{wdc_forward.1} parent=1 // pred_fallthru
      _
    // Predicated region
    $region26: #{wdc_forward.1} parent=1 // pred_check
      _
    $region27: #{wdc_forward.1} parent=1 // pred_check_branch
      %57 = sbr.rel (0) target = $region29
    $region28: #{wdc_forward.1} parent=1 // pred_region
      %s59 = ssub.s32 32, 32
      %60 = vsyncadd [#allocation5], %s59
      %s62 = sshll.u32 [#allocation4], 4
      %s63 = int_to_ptr.vmem [resolvable:$true] %s62
      %65 = dma.hbm_to_vmem [thread:$0]  %s6, 32, %s63, [#allocation5]
    $region29: #{wdc_forward.1} parent=1 // pred_fallthru
      _
    // Predicated region
    $region30: #{wdc_forward.1} parent=1 // pred_check
      _
    $region31: #{wdc_forward.1} parent=1 // pred_check_branch
      %67 = sbr.rel (0) target = $region33
    $region32: #{wdc_forward.1} parent=1 // pred_region
      _
    $region33: #{wdc_forward.1} parent=1 // pred_fallthru
      _
    // Predicated region
    $region34: #{wdc_forward.1} parent=1 // pred_check
      _
    $region35: #{wdc_forward.1} parent=1 // pred_check_branch
      %69 = sbr.rel (0) target = $region37
    $region36: #{wdc_forward.1} parent=1 // pred_region
      %s71 = ssub.s32 32, 32
      %72 = vsyncadd [#allocation5], %s71
      %s74 = sshll.u32 [#allocation6], 4
      %s75 = int_to_ptr.vmem [resolvable:$true] %s74
      %77 = dma.hbm_to_vmem [thread:$0]  %s8, 32, %s75, [#allocation5]
    $region37: #{wdc_forward.1} parent=1 // pred_fallthru
      _
    // Predicated region
    $region38: #{wdc_forward.1} parent=1 // pred_check
      _
    $region39: #{wdc_forward.1} parent=1 // pred_check_branch
      %79 = sbr.rel (0) target = $region41
    $region40: #{wdc_forward.1} parent=1 // pred_region
      _
    $region41: #{wdc_forward.1} parent=1 // pred_fallthru
      _
    // Predicated region
    $region42: #{wdc_forward.1} parent=1 // pred_check
      _
    $region43: #{wdc_forward.1} parent=1 // pred_check_branch
      %81 = sbr.rel (0) target = $region45
    $region44: #{wdc_forward.1} parent=1 // pred_region
      %s83 = ssub.s32 32, 32
      %84 = vsyncadd [#allocation8], %s83
      %s86 = sshll.u32 [#allocation7], 4
      %s87 = int_to_ptr.vmem [resolvable:$true] %s86
      %89 = dma.hbm_to_vmem [thread:$0]  %s10, 32, %s87, [#allocation8]
    $region45: #{wdc_forward.1} parent=1 // pred_fallthru
      _
    // Predicated region
    $region46: #{wdc_forward.1} parent=1 // pred_check
      _
    $region47: #{wdc_forward.1} parent=1 // pred_check_branch
      %91 = sbr.rel (0) target = $region49
    $region48: #{wdc_forward.1} parent=1 // pred_region
      _
    $region49: #{wdc_forward.1} parent=1 // pred_fallthru
      _
    // Predicated region
    $region50: #{wdc_forward.1} parent=1 // pred_check
      _
    $region51: #{wdc_forward.1} parent=1 // pred_check_branch
      %93 = sbr.rel (0) target = $region53
    $region52: #{wdc_forward.1} parent=1 // pred_region
      %s95 = ssub.s32 32, 32
      %96 = vsyncadd [#allocation8], %s95
      %s98 = sshll.u32 [#allocation9], 4
      %s99 = int_to_ptr.vmem [resolvable:$true] %s98
      %101 = dma.hbm_to_vmem [thread:$0]  %s12, 32, %s99, [#allocation8]
    $region53: #{wdc_forward.1} parent=1 // pred_fallthru
      _
    // Predicated region
    $region54: #{wdc_forward.1} parent=1 // pred_check
      _
    $region55: #{wdc_forward.1} parent=1 // pred_check_branch
      %103 = sbr.rel (0) target = $region57
    $region56: #{wdc_forward.1} parent=1 // pred_region
      _
    $region57: #{wdc_forward.1} parent=1 // pred_fallthru
      _
    // Predicated region
    $region58: #{wdc_forward.1} parent=1 // pred_check
      _
    $region59: #{wdc_forward.1} parent=1 // pred_check_branch
      %105 = sbr.rel (0) target = $region61
    $region60: #{wdc_forward.1} parent=1 // pred_region
      %s107 = ssub.s32 3072, 3072
      %108 = vsyncadd [#allocation11], %s107
      %s109 = sshll.u32 [#allocation10], 4
      %s110 = int_to_ptr.vmem [resolvable:$true] %s109
      %115 = dma.hbm_to_vmem [thread:$0]  %s14, 3072, %s110, [#allocation11], 256, 256, 16
    $region61: #{wdc_forward.1} parent=1 // pred_fallthru
      _
    // Predicated region
    $region62: #{wdc_forward.1} parent=1 // pred_check
      _
    $region63: #{wdc_forward.1} parent=1 // pred_check_branch
      %117 = sbr.rel (0) target = $region65
    $region64: #{wdc_forward.1} parent=1 // pred_region
      _
    $region65: #{wdc_forward.1} parent=1 // pred_fallthru
      _
    // Predicated region
    $region66: #{wdc_forward.1} parent=1 // pred_check
      _
    $region67: #{wdc_forward.1} parent=1 // pred_check_branch
      %119 = sbr.rel (0) target = $region69
    $region68: #{wdc_forward.1} parent=1 // pred_region
      %s121 = ssub.s32 32, 32
      %122 = vsyncadd [#allocation11], %s121
      %s124 = sshll.u32 [#allocation12], 4
      %s125 = int_to_ptr.vmem [resolvable:$true] %s124
      %127 = dma.hbm_to_vmem [thread:$0]  %s16, 32, %s125, [#allocation11]
    $region69: #{wdc_forward.1} parent=1 // pred_fallthru
      _
    // Predicated region
    $region70: #{wdc_forward.1} parent=1 // pred_check
      _
    $region71: #{wdc_forward.1} parent=1 // pred_check_branch
      %129 = sbr.rel (0) target = $region73
    $region72: #{wdc_forward.1} parent=1 // pred_region
      %s131 = ssub.s32 8192, 8192
      %132 = vsyncadd [#allocation14], %s131
      %s133 = sshll.u32 [#allocation13], 4
      %s134 = int_to_ptr.vmem [resolvable:$true] %s133
      %139 = dma.hbm_to_vmem [thread:$0]  %s17, 8192, %s134, [#allocation14], 256, 256, 16
    $region73: #{wdc_forward.1} parent=1 // pred_fallthru
      _
    // Predicated region
    $region74: #{wdc_forward.1} parent=1 // pred_check
      _
    $region75: #{wdc_forward.1} parent=1 // pred_check_branch
      %141 = sbr.rel (0) target = $region77
    $region76: #{wdc_forward.1} parent=1 // pred_region
      %s143 = ssub.s32 32, 32
      %144 = vsyncadd [#allocation14], %s143
      %s146 = sshll.u32 [#allocation15], 4
      %s147 = int_to_ptr.vmem [resolvable:$true] %s146
      %149 = dma.hbm_to_vmem [thread:$0]  %s18, 32, %s147, [#allocation14]
    $region77: #{wdc_forward.1} parent=1 // pred_fallthru
      _
    // Predicated region
    $region78: #{wdc_forward.1} parent=1 // pred_check
      _
    $region79: #{wdc_forward.1} parent=1 // pred_check_branch
      %151 = sbr.rel (0) target = $region81
    $region80: #{wdc_forward.1} parent=1 // pred_region
      _
    $region81: #{wdc_forward.1} parent=1 // pred_fallthru
      _
    // Predicated region
    $region82: #{wdc_forward.1} parent=1 // pred_check
      _
    $region83: #{wdc_forward.1} parent=1 // pred_check_branch
      %153 = sbr.rel (0) target = $region85
    $region84: #{wdc_forward.1} parent=1 // pred_region
      _
    $region85: #{wdc_forward.1} parent=1 // pred_fallthru
      _
    // Predicated region
    $region86: #{wdc_forward.1} parent=1 // pred_check
      _
    $region87: #{wdc_forward.1} parent=1 // pred_check_branch
      %155 = sbr.rel (0) target = $region89
    $region88: #{wdc_forward.1} parent=1 // pred_region
      %s157 = ssub.s32 16, 16
      %158 = vsyncadd [#allocation17], %s157
      %s160 = sshll.u32 [#allocation16], 4
      %s161 = int_to_ptr.vmem [resolvable:$true] %s160
      %163 = dma.hbm_to_vmem [thread:$0]  %s21, 16, %s161, [#allocation17]
    $region89: #{wdc_forward.1} parent=1 // pred_fallthru
      _
    // Predicated region
    $region90: #{wdc_forward.1} parent=1 // pred_check
      _
    $region91: #{wdc_forward.1} parent=1 // pred_check_branch
      %165 = sbr.rel (0) target = $region93
    $region92: #{wdc_forward.1} parent=1 // pred_region
      _
    $region93: #{wdc_forward.1} parent=1 // pred_fallthru
      _
    // Predicated region
    $region94: #{wdc_forward.1} parent=1 // pred_check
      _
    $region95: #{wdc_forward.1} parent=1 // pred_check_branch
      %167 = sbr.rel (0) target = $region97
    $region96: #{wdc_forward.1} parent=1 // pred_region
      %s169 = ssub.s32 16, 16
      %170 = vsyncadd [#allocation17], %s169
      %s172 = sshll.u32 [#allocation18], 4
      %s173 = int_to_ptr.vmem [resolvable:$true] %s172
      %175 = dma.hbm_to_vmem [thread:$0]  %s23, 16, %s173, [#allocation17]
    $region97: #{wdc_forward.1} parent=1 // pred_fallthru
      _
    // Predicated region
    $region98: #{wdc_forward.1} parent=1 // pred_check
      _
    $region99: #{wdc_forward.1} parent=1 // pred_check_branch
      %177 = sbr.rel (0) target = $region101
    $region100: #{wdc_forward.1} parent=1 // pred_region
      _
    $region101: #{wdc_forward.1} parent=1 // pred_fallthru
      _
    // Predicated region
    $region102: #{wdc_forward.1} parent=1 // pred_check
      _
    $region103: #{wdc_forward.1} parent=1 // pred_check_branch
      %179 = sbr.rel (0) target = $region105
    $region104: #{wdc_forward.1} parent=1 // pred_region
      %180 = dma.done [#allocation3], 16
    $region105: #{wdc_forward.1} parent=1 // pred_fallthru
      _
    // Predicated region
    $region106: #{wdc_forward.1} parent=1 // pred_check
      _
    $region107: #{wdc_forward.1} parent=1 // pred_check_branch
      %182 = sbr.rel (0) target = $region109
    $region108: #{wdc_forward.1} parent=1 // pred_region
      %183 = dma.done [#allocation5], 32
    $region109: #{wdc_forward.1} parent=1 // pred_fallthru
      _
    // Predicated region
    $region110: #{wdc_forward.1} parent=1 // pred_check
      _
    $region111: #{wdc_forward.1} parent=1 // pred_check_branch
      %185 = sbr.rel (0) target = $region113
    $region112: #{wdc_forward.1} parent=1 // pred_region
      %186 = dma.done [#allocation5], 32
    $region113: #{wdc_forward.1} parent=1 // pred_fallthru
      _
    // Predicated region
    $region114: #{wdc_forward.1} parent=1 // pred_check
      _
    $region115: #{wdc_forward.1} parent=1 // pred_check_branch
      %188 = sbr.rel (0) target = $region117
    $region116: #{wdc_forward.1} parent=1 // pred_region
      %189 = dma.done [#allocation8], 32
    $region117: #{wdc_forward.1} parent=1 // pred_fallthru
      _
    // Predicated region
    $region118: #{wdc_forward.1} parent=1 // pred_check
      _
    $region119: #{wdc_forward.1} parent=1 // pred_check_branch
      %191 = sbr.rel (0) target = $region121
    $region120: #{wdc_forward.1} parent=1 // pred_region
      %192 = dma.done [#allocation8], 32
    $region121: #{wdc_forward.1} parent=1 // pred_fallthru
      _
    // Predicated region
    $region122: #{wdc_forward.1} parent=1 // pred_check
      _
    $region123: #{wdc_forward.1} parent=1 // pred_check_branch
      %194 = sbr.rel (0) target = $region125
    $region124: #{wdc_forward.1} parent=1 // pred_region
      %195 = dma.done [#allocation11], 3072
    $region125: #{wdc_forward.1} parent=1 // pred_fallthru
      _
    // Predicated region
    $region126: #{wdc_forward.1} parent=1 // pred_check
      _
    $region127: #{wdc_forward.1} parent=1 // pred_check_branch
      %197 = sbr.rel (0) target = $region129
    $region128: #{wdc_forward.1} parent=1 // pred_region
      %198 = dma.done [#allocation11], 32
    $region129: #{wdc_forward.1} parent=1 // pred_fallthru
      _
    // Predicated region
    $region130: #{wdc_forward.1} parent=1 // pred_check
      _
    $region131: #{wdc_forward.1} parent=1 // pred_check_branch
      %200 = sbr.rel (0) target = $region133
    $region132: #{wdc_forward.1} parent=1 // pred_region
      %201 = dma.done [#allocation14], 8192
    $region133: #{wdc_forward.1} parent=1 // pred_fallthru
      _
    // Predicated region
    $region134: #{wdc_forward.1} parent=1 // pred_check
      _
    $region135: #{wdc_forward.1} parent=1 // pred_check_branch
      %203 = sbr.rel (0) target = $region137
    $region136: #{wdc_forward.1} parent=1 // pred_region
      %204 = dma.done [#allocation14], 32
    $region137: #{wdc_forward.1} parent=1 // pred_fallthru
      _
    // Predicated region
    $region138: #{wdc_forward.1} parent=1 // pred_check
      _
    $region139: #{wdc_forward.1} parent=1 // pred_check_branch
      %206 = sbr.rel (0) target = $region141
    $region140: #{wdc_forward.1} parent=1 // pred_region
      %207 = dma.done [#allocation17], 16
    $region141: #{wdc_forward.1} parent=1 // pred_fallthru
      _
    // Predicated region
    $region142: #{wdc_forward.1} parent=1 // pred_check
      _
    $region143: #{wdc_forward.1} parent=1 // pred_check_branch
      %209 = sbr.rel (0) target = $region145
    $region144: #{wdc_forward.1} parent=1 // pred_region
      %210 = dma.done [#allocation17], 16
    $region145: #{wdc_forward.1} parent=1 // pred_fallthru
      _
    %v211 = vld [vmem:[%s1] sm:$0x3]
    %v212 = vlaneseq
    %v213 = vshrl.u32 %v212, 7
    %v214 = vsub.s32 0, %v213
    %v215 = vrot.slane %v211, %v214
    %217 = vbcast.lane.b32.xlu0 %v215, 256
    %v218 = vpop.permute.xlu0 %217
    %v219 = vlaneseq
    %v220 = vshrl.u32 %v219, 7
    %v221 = vsub.s32 1, %v220
    %v222 = vrot.slane %v211, %v221
    %224 = vbcast.lane.b32.xlu0 %v222, 256
    %v225 = vpop.permute.xlu0 %224
    %v226 = vld [vmem:[%s0] sm:$0xff]
    %v227 = vld [vmem:[%s0 + $0x8] sm:$0xff]
    %v228 = vld [vmem:[%s2] sm:$0xff]
    %v229 = vld [vmem:[%s2 + $0x8] sm:$0xff]
    %v230 = vld [vmem:[%s2 + $0x10] sm:$0xff]
    %v231 = vld [vmem:[%s2 + $0x18] sm:$0xff]
    %v232 = vld [vmem:[%s2 + $0x20] sm:$0xff]
    %v233 = vld [vmem:[%s2 + $0x28] sm:$0xff]
    %v234 = vld [vmem:[%s2 + $0x30] sm:$0xff]
    %v235 = vld [vmem:[%s2 + $0x38] sm:$0x7f]
    %v236 = vld [vmem:[%s3] sm:$0x1]
    %v238 = vlaneseq
    %v239 = vshrl.u32 %v238, 7
    %v240 = vsub.s32 0, %v239
    %v241 = vrot.slane %v236, %v240
    %vm243 = vcmask 515072
    %v245 = vsel %vm243, %v226, 0
    %v248 = vsel %vm243, %v227, 0
    %vm250 = vcmask 1046528
    %v252 = vsel %vm250, %v235, 0
    %254 = vmatprep.subr.mxu0 0.0
    %255 = vmatpush1.msra.mxu0 %v228
    %256 = vmatprep.subr.mxu0 0.0
    %257 = vmatpush1.msra.mxu0 %v229
    %258 = vmatprep.subr.mxu0 0.0
    %259 = vmatpush1.msra.mxu0 %v230
    %260 = vmatprep.subr.mxu0 0.0
    %261 = vmatpush1.msra.mxu0 %v231
    %262 = vmatprep.subr.mxu0 0.0
    %263 = vmatpush1.msra.mxu0 %v232
    %264 = vmatprep.subr.mxu0 0.0
    %265 = vmatpush1.msra.mxu0 %v233
    %266 = vmatprep.subr.mxu0 0.0
    %267 = vmatpush1.msra.mxu0 %v234
    %268 = vmatprep.subr.mxu0 0.0
    %269 = vmatpush1.msra.mxu0 %v252
    %270 = vmatprep.subr.mxu0 0.0
    %271 = vmatpush1.msra.mxu0 0.0
    %272 = vmatprep.subr.mxu0 0.0
    %273 = vmatpush1.msra.mxu0 0.0
    %274 = vmatprep.subr.mxu0 0.0
    %275 = vmatpush1.msra.mxu0 0.0
    %276 = vmatprep.subr.mxu0 0.0
    %277 = vmatpush1.msra.mxu0 0.0
    %278 = vmatprep.subr.mxu0 0.0
    %279 = vmatpush1.msra.mxu0 0.0
    %280 = vmatprep.subr.mxu0 0.0
    %281 = vmatpush1.msra.mxu0 0.0
    %282 = vmatprep.subr.mxu0 0.0
    %283 = vmatpush1.msra.mxu0 0.0
    %284 = vmatprep.subr.mxu0 0.0
    %285 = vmatpush1.msra.mxu0 0.0
    %286 = vmatprep.subr.mxu0 0.0
    %287 = vmatpush1.msra.mxu0 0.0
    %288 = vmatprep.subr.mxu0 0.0
    %289 = vmatpush1.msra.mxu0 0.0
    %290 = vmatprep.subr.mxu0 0.0
    %291 = vmatpush1.msra.mxu0 0.0
    %292 = vmatprep.subr.mxu0 0.0
    %293 = vmatpush1.msra.mxu0 0.0
    %294 = vmatprep.subr.mxu0 0.0
    %295 = vmatpush1.msra.mxu0 0.0
    %296 = vmatprep.subr.mxu0 0.0
    %297 = vmatpush1.msra.mxu0 0.0
    %298 = vmatprep.subr.mxu0 0.0
    %299 = vmatpush1.msra.mxu0 0.0
    %300 = vmatprep.subr.mxu0 0.0
    %301 = vmatpush1.msra.mxu0 0.0
    %302 = vmatprep.subr.mxu0 0.0
    %303 = vmatpush1.msra.mxu0 0.0
    %304 = vmatprep.subr.mxu0 0.0
    %305 = vmatpush1.msra.mxu0 0.0
    %306 = vmatprep.subr.mxu0 0.0
    %307 = vmatpush1.msra.mxu0 0.0
    %308 = vmatprep.subr.mxu0 0.0
    %309 = vmatpush1.msra.mxu0 0.0
    %310 = vmatprep.subr.mxu0 0.0
    %311 = vmatpush1.msra.mxu0 0.0
    %312 = vmatprep.subr.mxu0 0.0
    %313 = vmatpush1.msra.mxu0 0.0
    %314 = vmatprep.subr.mxu0 0.0
    %315 = vmatpush1.msra.mxu0 0.0
    %316 = vmatprep.subr.mxu0 0.0
    %317 = vmatpush1.msra.mxu0 0.0
    %318 = vmatprep.mubr.f32.mxu0 0.0
    %319 = vmatmul.mubr.f32.gmra.mrb[0].mxu0 %v245
    %v320 = vpop.f32.mrb[0].mxu0
    %v321 = vadd.f32 %v241, %v320
    %v322 = vpop.f32.mrb[0].mxu0
    %323 = vmatprep.mubr.f32.mxu0 0.0
    %324 = vmatmul.mubr.f32.gmra.mrb[0].mxu0 %v248
    %v325 = vpop.f32.mrb[0].mxu0
    %v326 = vadd.f32 %v241, %v325
    %v327 = vpop.f32.mrb[0].mxu0
    %328 = vdwg.mxu0
    %v329 = vmax.f32 %v321, 0.0
    %v330 = vmax.f32 %v326, 0.0
    %v331 = vmul.f32 %v329, %v218
    %v332 = vmul.f32 %v330, %v225
    %v335 = vrot.slane %v331, 7
    %v336 = vrot.slane %v332, 7
    %vm339 = vcmask 1040384
    %v340 = vsel %vm339, 0.0, %v335
    %v341 = vsel %vm339, 0.0, %v336
    %v342 = vsel %vm339, %v335, 0.0
    %v343 = vsel %vm339, %v336, 0.0
    %v348 = vrot.slane %v340, 1
    %v349 = vrot.slane %v342, 1
    %v350 = vsel %vm250, %v348, %v349
    %v351 = vrot.slane %v341, 1
    %v352 = vrot.slane %v343, 1
    %v353 = vsel %vm250, %v351, %v352
    %354 = vrot.lane.b32.xlu0 %v350, 32
    %v355 = vpop.permute.xlu0 %354
    %356 = vrot.lane.b32.xlu0 %v353, 32
    %v357 = vpop.permute.xlu0 %356
    %vm360 = vcmask 1045504
    %v361 = vrot.slane %v340, 2
    %v362 = vrot.slane %v342, 2
    %v363 = vsel %vm360, %v361, %v362
    %v364 = vrot.slane %v341, 2
    %v365 = vrot.slane %v343, 2
    %v366 = vsel %vm360, %v364, %v365
    %367 = vrot.lane.b32.xlu0 %v363, 64
    %v368 = vpop.permute.xlu0 %367
    %369 = vrot.lane.b32.xlu0 %v366, 64
    %v370 = vpop.permute.xlu0 %369
    %vm373 = vcmask 1044480
    %v374 = vrot.slane %v340, 3
    %v375 = vrot.slane %v342, 3
    %v376 = vsel %vm373, %v374, %v375
    %v377 = vrot.slane %v341, 3
    %v378 = vrot.slane %v343, 3
    %v379 = vsel %vm373, %v377, %v378
    %380 = vrot.lane.b32.xlu0 %v376, 96
    %v381 = vpop.permute.xlu0 %380
    %382 = vrot.lane.b32.xlu0 %v379, 96
    %v383 = vpop.permute.xlu0 %382
    %vm386 = vcmask 261120
    %v387 = vsel %vm386, %v340, %v355
    %v388 = vsel %vm386, %v341, %v357
    %vm389 = vcmask 523264
    %v390 = vsel %vm389, %v387, %v368
    %v391 = vsel %vm389, %v388, %v370
    %vm392 = vcmask 785408
    %v393 = vsel %vm392, %v390, %v381
    %v394 = vsel %vm392, %v391, %v383
    %v395 = vld [vmem:[%s4] sm:$0xff]
    %v396 = vld [vmem:[%s4 + $0x8] sm:$0xff]
    %v397 = vld [vmem:[%s4 + $0x10] sm:$0xff]
    %v398 = vld [vmem:[%s4 + $0x18] sm:$0xff]
    %v399 = vld [vmem:[%s4 + $0x20] sm:$0xff]
    %v400 = vld [vmem:[%s4 + $0x28] sm:$0xff]
    %v401 = vld [vmem:[%s4 + $0x30] sm:$0xff]
    %v402 = vld [vmem:[%s4 + $0x38] sm:$0xff]
    %v403 = vld [vmem:[%s4 + $0x40] sm:$0xff]
    %v404 = vld [vmem:[%s4 + $0x48] sm:$0xff]
    %v405 = vld [vmem:[%s4 + $0x50] sm:$0xff]
    %v406 = vld [vmem:[%s4 + $0x58] sm:$0xff]
    %v407 = vld [vmem:[%s4 + $0x60] sm:$0xff]
    %v408 = vld [vmem:[%s4 + $0x68] sm:$0xff]
    %v409 = vld [vmem:[%s4 + $0x70] sm:$0xff]
    %v410 = vld [vmem:[%s4 + $0x78] sm:$0xff]
    %v411 = vld [vmem:[#allocation2] sm:$0x1]
    %v413 = vlaneseq
    %v414 = vshrl.u32 %v413, 7
    %v415 = vsub.s32 0, %v414
    %v416 = vrot.slane %v411, %v415
    %418 = vmatprep.subr.mxu0 0.0
    %419 = vmatpush1.msra.mxu0 %v395
    %420 = vmatprep.subr.mxu0 0.0
    %421 = vmatpush1.msra.mxu0 %v396
    %422 = vmatprep.subr.mxu0 0.0
    %423 = vmatpush1.msra.mxu0 %v397
    %424 = vmatprep.subr.mxu0 0.0
    %425 = vmatpush1.msra.mxu0 %v398
    %426 = vmatprep.subr.mxu0 0.0
    %427 = vmatpush1.msra.mxu0 %v399
    %428 = vmatprep.subr.mxu0 0.0
    %429 = vmatpush1.msra.mxu0 %v400
    %430 = vmatprep.subr.mxu0 0.0
    %431 = vmatpush1.msra.mxu0 %v401
    %432 = vmatprep.subr.mxu0 0.0
    %433 = vmatpush1.msra.mxu0 %v402
    %434 = vmatprep.subr.mxu0 0.0
    %435 = vmatpush1.msra.mxu0 %v403
    %436 = vmatprep.subr.mxu0 0.0
    %437 = vmatpush1.msra.mxu0 %v404
    %438 = vmatprep.subr.mxu0 0.0
    %439 = vmatpush1.msra.mxu0 %v405
    %440 = vmatprep.subr.mxu0 0.0
    %441 = vmatpush1.msra.mxu0 %v406
    %442 = vmatprep.subr.mxu0 0.0
    %443 = vmatpush1.msra.mxu0 %v407
    %444 = vmatprep.subr.mxu0 0.0
    %445 = vmatpush1.msra.mxu0 %v408
    %446 = vmatprep.subr.mxu0 0.0
    %447 = vmatpush1.msra.mxu0 %v409
    %448 = vmatprep.subr.mxu0 0.0
    %449 = vmatpush1.msra.mxu0 %v410
    %450 = vmatprep.subr.mxu0 0.0
    %451 = vmatpush1.msra.mxu0 0.0
    %452 = vmatprep.subr.mxu0 0.0
    %453 = vmatpush1.msra.mxu0 0.0
    %454 = vmatprep.subr.mxu0 0.0
    %455 = vmatpush1.msra.mxu0 0.0
    %456 = vmatprep.subr.mxu0 0.0
    %457 = vmatpush1.msra.mxu0 0.0
    %458 = vmatprep.subr.mxu0 0.0
    %459 = vmatpush1.msra.mxu0 0.0
    %460 = vmatprep.subr.mxu0 0.0
    %461 = vmatpush1.msra.mxu0 0.0
    %462 = vmatprep.subr.mxu0 0.0
    %463 = vmatpush1.msra.mxu0 0.0
    %464 = vmatprep.subr.mxu0 0.0
    %465 = vmatpush1.msra.mxu0 0.0
    %466 = vmatprep.subr.mxu0 0.0
    %467 = vmatpush1.msra.mxu0 0.0
    %468 = vmatprep.subr.mxu0 0.0
    %469 = vmatpush1.msra.mxu0 0.0
    %470 = vmatprep.subr.mxu0 0.0
    %471 = vmatpush1.msra.mxu0 0.0
    %472 = vmatprep.subr.mxu0 0.0
    %473 = vmatpush1.msra.mxu0 0.0
    %474 = vmatprep.subr.mxu0 0.0
    %475 = vmatpush1.msra.mxu0 0.0
    %476 = vmatprep.subr.mxu0 0.0
    %477 = vmatpush1.msra.mxu0 0.0
    %478 = vmatprep.subr.mxu0 0.0
    %479 = vmatpush1.msra.mxu0 0.0
    %480 = vmatprep.subr.mxu0 0.0
    %481 = vmatpush1.msra.mxu0 0.0
    %482 = vmatprep.mubr.f32.mxu0 0.0
    %483 = vmatmul.mubr.f32.gmra.mrb[0].mxu0 %v393
    %v484 = vpop.f32.mrb[0].mxu0
    %v485 = vadd.f32 %v416, %v484
    %v486 = vpop.f32.mrb[0].mxu0
    %487 = vmatprep.mubr.f32.mxu0 0.0
    %488 = vmatmul.mubr.f32.gmra.mrb[0].mxu0 %v394
    %v489 = vpop.f32.mrb[0].mxu0
    %v490 = vadd.f32 %v416, %v489
    %v491 = vpop.f32.mrb[0].mxu0
    %492 = vdwg.mxu0
    %v493 = vsub.f32 %v211, 1.0
    %v494 = vmul.f32 %v493, 1e+09
    %v497 = vunpack.c.l.s4 1966171168
    %v498 = vunpack.c.0.s8 %v497
    %v499 = vlaneseq
    %v500 = vshrl.u32 %v499, 7
    %v501 = vsub.s32 %v498, %v500
    %v502 = vrot.slane %v494, %v501
    %v503 = vcombine.high %v502, %v502
    %v505 = vunpack.c.l.s4 1966171168
    %v506 = vunpack.c.0.s8 %v505
    %v507 = vlaneseq
    %v508 = vshrl.u32 %v507, 7
    %v509 = vsub.s32 %v506, %v508
    %v510 = vrot.slane %v502, %v509
    %v512 = vunpack.c.l.s4 1966171168
    %v513 = vunpack.c.0.s8 %v512
    %v514 = vlaneseq
    %v515 = vshrl.u32 %v514, 7
    %v516 = vsub.s32 %v513, %v515
    %v517 = vrot.slane %v503, %v516
    %v518 = vlaneseq
    %v519 = vshrl.u32 %v518, 7
    %v520 = vsub.s32 0, %v519
    %v521 = vrot.slane %v510, %v520
    %v522 = vlaneseq
    %v523 = vshrl.u32 %v522, 7
    %v524 = vsub.s32 0, %v523
    %v525 = vrot.slane %v517, %v524
    %v529 = vsel %vm386, %v485, 0
    %531 = vmatprep.subr.mxu0 0.0
    %532 = vmatpush1.xpose.msra.mxu0 %v529
    %533 = vmatprep.subr.mxu0 0.0
    %534 = vmatpush1.xpose.msra.mxu0 0.0
    %535 = vmatprep.subr.mxu0 0.0
    %536 = vmatpush1.xpose.msra.mxu0 0.0
    %537 = vmatprep.subr.mxu0 0.0
    %538 = vmatpush1.xpose.msra.mxu0 0.0
    %539 = vmatprep.subr.mxu0 0.0
    %540 = vmatpush1.xpose.msra.mxu0 0.0
    %541 = vmatprep.subr.mxu0 0.0
    %542 = vmatpush1.xpose.msra.mxu0 0.0
    %543 = vmatprep.subr.mxu0 0.0
    %544 = vmatpush1.xpose.msra.mxu0 0.0
    %545 = vmatprep.subr.mxu0 0.0
    %546 = vmatpush1.xpose.msra.mxu0 0.0
    %547 = vmatprep.subr.mxu0 0.0
    %548 = vmatpush1.xpose.msra.mxu0 0.0
    %549 = vmatprep.subr.mxu0 0.0
    %550 = vmatpush1.xpose.msra.mxu0 0.0
    %551 = vmatprep.subr.mxu0 0.0
    %552 = vmatpush1.xpose.msra.mxu0 0.0
    %553 = vmatprep.subr.mxu0 0.0
    %554 = vmatpush1.xpose.msra.mxu0 0.0
    %555 = vmatprep.subr.mxu0 0.0
    %556 = vmatpush1.xpose.msra.mxu0 0.0
    %557 = vmatprep.subr.mxu0 0.0
    %558 = vmatpush1.xpose.msra.mxu0 0.0
    %559 = vmatprep.subr.mxu0 0.0
    %560 = vmatpush1.xpose.msra.mxu0 0.0
    %561 = vmatprep.subr.mxu0 0.0
    %562 = vmatpush1.xpose.msra.mxu0 0.0
    %563 = vmatprep.subr.mxu0 0.0
    %564 = vmatpush1.xpose.msra.mxu0 0.0
    %565 = vmatprep.subr.mxu0 0.0
    %566 = vmatpush1.xpose.msra.mxu0 0.0
    %567 = vmatprep.subr.mxu0 0.0
    %568 = vmatpush1.xpose.msra.mxu0 0.0
    %569 = vmatprep.subr.mxu0 0.0
    %570 = vmatpush1.xpose.msra.mxu0 0.0
    %571 = vmatprep.subr.mxu0 0.0
    %572 = vmatpush1.xpose.msra.mxu0 0.0
    %573 = vmatprep.subr.mxu0 0.0
    %574 = vmatpush1.xpose.msra.mxu0 0.0
    %575 = vmatprep.subr.mxu0 0.0
    %576 = vmatpush1.xpose.msra.mxu0 0.0
    %577 = vmatprep.subr.mxu0 0.0
    %578 = vmatpush1.xpose.msra.mxu0 0.0
    %579 = vmatprep.subr.mxu0 0.0
    %580 = vmatpush1.xpose.msra.mxu0 0.0
    %581 = vmatprep.subr.mxu0 0.0
    %582 = vmatpush1.xpose.msra.mxu0 0.0
    %583 = vmatprep.subr.mxu0 0.0
    %584 = vmatpush1.xpose.msra.mxu0 0.0
    %585 = vmatprep.subr.mxu0 0.0
    %586 = vmatpush1.xpose.msra.mxu0 0.0
    %587 = vmatprep.subr.mxu0 0.0
    %588 = vmatpush1.xpose.msra.mxu0 0.0
    %589 = vmatprep.subr.mxu0 0.0
    %590 = vmatpush1.xpose.msra.mxu0 0.0
    %591 = vmatprep.subr.mxu0 0.0
    %592 = vmatpush1.xpose.msra.mxu0 0.0
    %593 = vmatprep.subr.mxu0 0.0
    %594 = vmatpush1.xpose.msra.mxu0 0.0
    %595 = vmatprep.mubr.f32.mxu0 0.0
    %596 = vmatmul.mubr.f32.gmra.mrb[0].mxu0 %v529
    %v597 = vpop.f32.mrb[0].mxu0
    %v598 = vadd.f32 %v521, %v597
    %v599 = vpop.f32.mrb[0].mxu0
    %600 = vdwg.mxu0
    %v602 = vsel %vm386, %v490, 0
    %604 = vmatprep.subr.mxu0 0.0
    %605 = vmatpush1.xpose.msra.mxu0 %v602
    %606 = vmatprep.subr.mxu0 0.0
    %607 = vmatpush1.xpose.msra.mxu0 0.0
    %608 = vmatprep.subr.mxu0 0.0
    %609 = vmatpush1.xpose.msra.mxu0 0.0
    %610 = vmatprep.subr.mxu0 0.0
    %611 = vmatpush1.xpose.msra.mxu0 0.0
    %612 = vmatprep.subr.mxu0 0.0
    %613 = vmatpush1.xpose.msra.mxu0 0.0
    %614 = vmatprep.subr.mxu0 0.0
    %615 = vmatpush1.xpose.msra.mxu0 0.0
    %616 = vmatprep.subr.mxu0 0.0
    %617 = vmatpush1.xpose.msra.mxu0 0.0
    %618 = vmatprep.subr.mxu0 0.0
    %619 = vmatpush1.xpose.msra.mxu0 0.0
    %620 = vmatprep.subr.mxu0 0.0
    %621 = vmatpush1.xpose.msra.mxu0 0.0
    %622 = vmatprep.subr.mxu0 0.0
    %623 = vmatpush1.xpose.msra.mxu0 0.0
    %624 = vmatprep.subr.mxu0 0.0
    %625 = vmatpush1.xpose.msra.mxu0 0.0
    %626 = vmatprep.subr.mxu0 0.0
    %627 = vmatpush1.xpose.msra.mxu0 0.0
    %628 = vmatprep.subr.mxu0 0.0
    %629 = vmatpush1.xpose.msra.mxu0 0.0
    %630 = vmatprep.subr.mxu0 0.0
    %631 = vmatpush1.xpose.msra.mxu0 0.0
    %632 = vmatprep.subr.mxu0 0.0
    %633 = vmatpush1.xpose.msra.mxu0 0.0
    %634 = vmatprep.subr.mxu0 0.0
    %635 = vmatpush1.xpose.msra.mxu0 0.0
    %636 = vmatprep.subr.mxu0 0.0
    %637 = vmatpush1.xpose.msra.mxu0 0.0
    %638 = vmatprep.subr.mxu0 0.0
    %639 = vmatpush1.xpose.msra.mxu0 0.0
    %640 = vmatprep.subr.mxu0 0.0
    %641 = vmatpush1.xpose.msra.mxu0 0.0
    %642 = vmatprep.subr.mxu0 0.0
    %643 = vmatpush1.xpose.msra.mxu0 0.0
    %644 = vmatprep.subr.mxu0 0.0
    %645 = vmatpush1.xpose.msra.mxu0 0.0
    %646 = vmatprep.subr.mxu0 0.0
    %647 = vmatpush1.xpose.msra.mxu0 0.0
    %648 = vmatprep.subr.mxu0 0.0
    %649 = vmatpush1.xpose.msra.mxu0 0.0
    %650 = vmatprep.subr.mxu0 0.0
    %651 = vmatpush1.xpose.msra.mxu0 0.0
    %652 = vmatprep.subr.mxu0 0.0
    %653 = vmatpush1.xpose.msra.mxu0 0.0
    %654 = vmatprep.subr.mxu0 0.0
    %655 = vmatpush1.xpose.msra.mxu0 0.0
    %656 = vmatprep.subr.mxu0 0.0
    %657 = vmatpush1.xpose.msra.mxu0 0.0
    %658 = vmatprep.subr.mxu0 0.0
    %659 = vmatpush1.xpose.msra.mxu0 0.0
    %660 = vmatprep.subr.mxu0 0.0
    %661 = vmatpush1.xpose.msra.mxu0 0.0
    %662 = vmatprep.subr.mxu0 0.0
    %663 = vmatpush1.xpose.msra.mxu0 0.0
    %664 = vmatprep.subr.mxu0 0.0
    %665 = vmatpush1.xpose.msra.mxu0 0.0
    %666 = vmatprep.subr.mxu0 0.0
    %667 = vmatpush1.xpose.msra.mxu0 0.0
    %668 = vmatprep.mubr.f32.mxu0 0.0
    %669 = vmatmul.mubr.f32.gmra.mrb[0].mxu0 %v602
    %v670 = vpop.f32.mrb[0].mxu0
    %v671 = vadd.f32 %v525, %v670
    %v672 = vpop.f32.mrb[0].mxu0
    %673 = vdwg.mxu0
    %vm674 = vcmask 64512
    %v675 = vsel %vm674, %v598, -inf
    %676 = vmax.xlane.f32.xlu0 %v675
    %v677 = vpop.xlane.xlu0 %676
    %v678 = vsel %vm674, %v671, -inf
    %679 = vmax.xlane.f32.xlu0 %v678
    %v680 = vpop.xlane.xlu0 %679
    %v681 = vsub.f32 %v598, %v677
    %v682 = vsub.f32 %v671, %v680
    %v683 = vmul.f32 %v681, 1.442695
    %v684 = vpow.pop %v683
    %v685 = vmul.f32 %v682, 1.442695
    %v686 = vpow.pop %v685
    %v687 = vsel %vm674, %v684, 0.0
    %688 = vadd.xlane.f32.xlu0 %v687
    %v689 = vpop.xlane.xlu0 %688
    %v690 = vsel %vm674, %v686, 0.0
    %691 = vadd.xlane.f32.xlu0 %v690
    %v692 = vpop.xlane.xlu0 %691
    %v693 = vrcp.pop %v689
    %v694 = vmul.f32 %v684, %v693
    %v695 = vrcp.pop %v692
    %v696 = vmul.f32 %v686, %v695
    %v698 = vsel %vm674, %v694, 0
    %700 = vmatprep.subr.mxu0 0.0
    %701 = vmatpush1.msra.mxu0 %v485
    %702 = vmatprep.subr.mxu0 0.0
    %703 = vmatpush1.msra.mxu0 0.0
    %704 = vmatprep.subr.mxu0 0.0
    %705 = vmatpush1.msra.mxu0 0.0
    %706 = vmatprep.subr.mxu0 0.0
    %707 = vmatpush1.msra.mxu0 0.0
    %708 = vmatprep.subr.mxu0 0.0
    %709 = vmatpush1.msra.mxu0 0.0
    %710 = vmatprep.subr.mxu0 0.0
    %711 = vmatpush1.msra.mxu0 0.0
    %712 = vmatprep.subr.mxu0 0.0
    %713 = vmatpush1.msra.mxu0 0.0
    %714 = vmatprep.subr.mxu0 0.0
    %715 = vmatpush1.msra.mxu0 0.0
    %716 = vmatprep.subr.mxu0 0.0
    %717 = vmatpush1.msra.mxu0 0.0
    %718 = vmatprep.subr.mxu0 0.0
    %719 = vmatpush1.msra.mxu0 0.0
    %720 = vmatprep.subr.mxu0 0.0
    %721 = vmatpush1.msra.mxu0 0.0
    %722 = vmatprep.subr.mxu0 0.0
    %723 = vmatpush1.msra.mxu0 0.0
    %724 = vmatprep.subr.mxu0 0.0
    %725 = vmatpush1.msra.mxu0 0.0
    %726 = vmatprep.subr.mxu0 0.0
    %727 = vmatpush1.msra.mxu0 0.0
    %728 = vmatprep.subr.mxu0 0.0
    %729 = vmatpush1.msra.mxu0 0.0
    %730 = vmatprep.subr.mxu0 0.0
    %731 = vmatpush1.msra.mxu0 0.0
    %732 = vmatprep.subr.mxu0 0.0
    %733 = vmatpush1.msra.mxu0 0.0
    %734 = vmatprep.subr.mxu0 0.0
    %735 = vmatpush1.msra.mxu0 0.0
    %736 = vmatprep.subr.mxu0 0.0
    %737 = vmatpush1.msra.mxu0 0.0
    %738 = vmatprep.subr.mxu0 0.0
    %739 = vmatpush1.msra.mxu0 0.0
    %740 = vmatprep.subr.mxu0 0.0
    %741 = vmatpush1.msra.mxu0 0.0
    %742 = vmatprep.subr.mxu0 0.0
    %743 = vmatpush1.msra.mxu0 0.0
    %744 = vmatprep.subr.mxu0 0.0
    %745 = vmatpush1.msra.mxu0 0.0
    %746 = vmatprep.subr.mxu0 0.0
    %747 = vmatpush1.msra.mxu0 0.0
    %748 = vmatprep.subr.mxu0 0.0
    %749 = vmatpush1.msra.mxu0 0.0
    %750 = vmatprep.subr.mxu0 0.0
    %751 = vmatpush1.msra.mxu0 0.0
    %752 = vmatprep.subr.mxu0 0.0
    %753 = vmatpush1.msra.mxu0 0.0
    %754 = vmatprep.subr.mxu0 0.0
    %755 = vmatpush1.msra.mxu0 0.0
    %756 = vmatprep.subr.mxu0 0.0
    %757 = vmatpush1.msra.mxu0 0.0
    %758 = vmatprep.subr.mxu0 0.0
    %759 = vmatpush1.msra.mxu0 0.0
    %760 = vmatprep.subr.mxu0 0.0
    %761 = vmatpush1.msra.mxu0 0.0
    %762 = vmatprep.subr.mxu0 0.0
    %763 = vmatpush1.msra.mxu0 0.0
    %764 = vmatprep.mubr.f32.mxu0 0.0
    %765 = vmatmul.mubr.f32.gmra.mrb[0].mxu0 %v698
    %v766 = vpop.f32.mrb[0].mxu0
    %v767 = vadd.f32 0.0, %v766
    %v768 = vpop.f32.mrb[0].mxu0
    %769 = vdwg.mxu0
    %v771 = vsel %vm674, %v696, 0
    %773 = vmatprep.subr.mxu0 0.0
    %774 = vmatpush1.msra.mxu0 %v490
    %775 = vmatprep.subr.mxu0 0.0
    %776 = vmatpush1.msra.mxu0 0.0
    %777 = vmatprep.subr.mxu0 0.0
    %778 = vmatpush1.msra.mxu0 0.0
    %779 = vmatprep.subr.mxu0 0.0
    %780 = vmatpush1.msra.mxu0 0.0
    %781 = vmatprep.subr.mxu0 0.0
    %782 = vmatpush1.msra.mxu0 0.0
    %783 = vmatprep.subr.mxu0 0.0
    %784 = vmatpush1.msra.mxu0 0.0
    %785 = vmatprep.subr.mxu0 0.0
    %786 = vmatpush1.msra.mxu0 0.0
    %787 = vmatprep.subr.mxu0 0.0
    %788 = vmatpush1.msra.mxu0 0.0
    %789 = vmatprep.subr.mxu0 0.0
    %790 = vmatpush1.msra.mxu0 0.0
    %791 = vmatprep.subr.mxu0 0.0
    %792 = vmatpush1.msra.mxu0 0.0
    %793 = vmatprep.subr.mxu0 0.0
    %794 = vmatpush1.msra.mxu0 0.0
    %795 = vmatprep.subr.mxu0 0.0
    %796 = vmatpush1.msra.mxu0 0.0
    %797 = vmatprep.subr.mxu0 0.0
    %798 = vmatpush1.msra.mxu0 0.0
    %799 = vmatprep.subr.mxu0 0.0
    %800 = vmatpush1.msra.mxu0 0.0
    %801 = vmatprep.subr.mxu0 0.0
    %802 = vmatpush1.msra.mxu0 0.0
    %803 = vmatprep.subr.mxu0 0.0
    %804 = vmatpush1.msra.mxu0 0.0
    %805 = vmatprep.subr.mxu0 0.0
    %806 = vmatpush1.msra.mxu0 0.0
    %807 = vmatprep.subr.mxu0 0.0
    %808 = vmatpush1.msra.mxu0 0.0
    %809 = vmatprep.subr.mxu0 0.0
    %810 = vmatpush1.msra.mxu0 0.0
    %811 = vmatprep.subr.mxu0 0.0
    %812 = vmatpush1.msra.mxu0 0.0
    %813 = vmatprep.subr.mxu0 0.0
    %814 = vmatpush1.msra.mxu0 0.0
    %815 = vmatprep.subr.mxu0 0.0
    %816 = vmatpush1.msra.mxu0 0.0
    %817 = vmatprep.subr.mxu0 0.0
    %818 = vmatpush1.msra.mxu0 0.0
    %819 = vmatprep.subr.mxu0 0.0
    %820 = vmatpush1.msra.mxu0 0.0
    %821 = vmatprep.subr.mxu0 0.0
    %822 = vmatpush1.msra.mxu0 0.0
    %823 = vmatprep.subr.mxu0 0.0
    %824 = vmatpush1.msra.mxu0 0.0
    %825 = vmatprep.subr.mxu0 0.0
    %826 = vmatpush1.msra.mxu0 0.0
    %827 = vmatprep.subr.mxu0 0.0
    %828 = vmatpush1.msra.mxu0 0.0
    %829 = vmatprep.subr.mxu0 0.0
    %830 = vmatpush1.msra.mxu0 0.0
    %831 = vmatprep.subr.mxu0 0.0
    %832 = vmatpush1.msra.mxu0 0.0
    %833 = vmatprep.subr.mxu0 0.0
    %834 = vmatpush1.msra.mxu0 0.0
    %835 = vmatprep.subr.mxu0 0.0
    %836 = vmatpush1.msra.mxu0 0.0
    %837 = vmatprep.mubr.f32.mxu0 0.0
    %838 = vmatmul.mubr.f32.gmra.mrb[0].mxu0 %v771
    %v839 = vpop.f32.mrb[0].mxu0
    %v840 = vadd.f32 0.0, %v839
    %v841 = vpop.f32.mrb[0].mxu0
    %842 = vdwg.mxu0
    %v843 = vmul.f32 %v767, %v218
    %v844 = vmul.f32 %v840, %v225
    %v845 = vsel %vm386, %v843, 0.0
    %v846 = vrot.slane %v845, 4
    %v847 = vadd.f32 %v845, %v846
    %v848 = vrot.slane %v847, 2
    %v849 = vadd.f32 %v847, %v848
    %v850 = vrot.slane %v849, 1
    %v851 = vadd.f32 %v849, %v850
    %v852 = vsel %vm386, %v844, 0.0
    %v853 = vrot.slane %v852, 4
    %v854 = vadd.f32 %v852, %v853
    %v855 = vrot.slane %v854, 2
    %v856 = vadd.f32 %v854, %v855
    %v857 = vrot.slane %v856, 1
    %v858 = vadd.f32 %v856, %v857
    %v859 = vld [vmem:[#allocation4] sm:$0x3]
    %v860 = vld [vmem:[%s7] sm:$0xff]
    %v861 = vld [vmem:[%s7 + $0x8] sm:$0xff]
    %v862 = vld [vmem:[%s7 + $0x10] sm:$0xff]
    %v863 = vld [vmem:[%s7 + $0x18] sm:$0xff]
    %v864 = vld [vmem:[%s7 + $0x20] sm:$0xff]
    %v865 = vld [vmem:[%s7 + $0x28] sm:$0xff]
    %v866 = vld [vmem:[%s7 + $0x30] sm:$0xff]
    %v867 = vld [vmem:[%s7 + $0x38] sm:$0xff]
    %v868 = vld [vmem:[%s7 + $0x40] sm:$0xff]
    %v869 = vld [vmem:[%s7 + $0x48] sm:$0xff]
    %v870 = vld [vmem:[%s7 + $0x50] sm:$0x7f]
    %v871 = vld [vmem:[%s7 + $0x58] sm:$0x7f]
    %v872 = vld [vmem:[#allocation6] sm:$0x3]
    %v874 = vlaneseq
    %v875 = vshrl.u32 %v874, 7
    %v876 = vsub.s32 0, %v875
    %v877 = vrot.slane %v872, %v876
    %v878 = vlaneseq
    %v879 = vshrl.u32 %v878, 7
    %v880 = vsub.s32 1, %v879
    %v881 = vrot.slane %v872, %v880
    %vm884 = vcmask 384000
    %v886 = vsel %vm884, %v859, 0
    %v889 = vsel %vm250, %v870, 0
    %v892 = vsel %vm250, %v871, 0
    %894 = vmatprep.subr.mxu0 %v861
    %895 = vmatpush1.msra.mxu0 %v860
    %896 = vmatprep.subr.mxu0 %v863
    %897 = vmatpush1.msra.mxu0 %v862
    %898 = vmatprep.subr.mxu0 %v865
    %899 = vmatpush1.msra.mxu0 %v864
    %900 = vmatprep.subr.mxu0 %v867
    %901 = vmatpush1.msra.mxu0 %v866
    %902 = vmatprep.subr.mxu0 %v869
    %903 = vmatpush1.msra.mxu0 %v868
    %904 = vmatprep.subr.mxu0 %v892
    %905 = vmatpush1.msra.mxu0 %v889
    %906 = vmatprep.subr.mxu0 0.0
    %907 = vmatpush1.msra.mxu0 0.0
    %908 = vmatprep.subr.mxu0 0.0
    %909 = vmatpush1.msra.mxu0 0.0
    %910 = vmatprep.subr.mxu0 0.0
    %911 = vmatpush1.msra.mxu0 0.0
    %912 = vmatprep.subr.mxu0 0.0
    %913 = vmatpush1.msra.mxu0 0.0
    %914 = vmatprep.subr.mxu0 0.0
    %915 = vmatpush1.msra.mxu0 0.0
    %916 = vmatprep.subr.mxu0 0.0
    %917 = vmatpush1.msra.mxu0 0.0
    %918 = vmatprep.subr.mxu0 0.0
    %919 = vmatpush1.msra.mxu0 0.0
    %920 = vmatprep.subr.mxu0 0.0
    %921 = vmatpush1.msra.mxu0 0.0
    %922 = vmatprep.subr.mxu0 0.0
    %923 = vmatpush1.msra.mxu0 0.0
    %924 = vmatprep.subr.mxu0 0.0
    %925 = vmatpush1.msra.mxu0 0.0
    %926 = vmatprep.subr.mxu0 0.0
    %927 = vmatpush1.msra.mxu0 0.0
    %928 = vmatprep.subr.mxu0 0.0
    %929 = vmatpush1.msra.mxu0 0.0
    %930 = vmatprep.subr.mxu0 0.0
    %931 = vmatpush1.msra.mxu0 0.0
    %932 = vmatprep.subr.mxu0 0.0
    %933 = vmatpush1.msra.mxu0 0.0
    %934 = vmatprep.subr.mxu0 0.0
    %935 = vmatpush1.msra.mxu0 0.0
    %936 = vmatprep.subr.mxu0 0.0
    %937 = vmatpush1.msra.mxu0 0.0
    %938 = vmatprep.subr.mxu0 0.0
    %939 = vmatpush1.msra.mxu0 0.0
    %940 = vmatprep.subr.mxu0 0.0
    %941 = vmatpush1.msra.mxu0 0.0
    %942 = vmatprep.subr.mxu0 0.0
    %943 = vmatpush1.msra.mxu0 0.0
    %944 = vmatprep.subr.mxu0 0.0
    %945 = vmatpush1.msra.mxu0 0.0
    %946 = vmatprep.subr.mxu0 0.0
    %947 = vmatpush1.msra.mxu0 0.0
    %948 = vmatprep.subr.mxu0 0.0
    %949 = vmatpush1.msra.mxu0 0.0
    %950 = vmatprep.subr.mxu0 0.0
    %951 = vmatpush1.msra.mxu0 0.0
    %952 = vmatprep.subr.mxu0 0.0
    %953 = vmatpush1.msra.mxu0 0.0
    %954 = vmatprep.subr.mxu0 0.0
    %955 = vmatpush1.msra.mxu0 0.0
    %956 = vmatprep.subr.mxu0 0.0
    %957 = vmatpush1.msra.mxu0 0.0
    %958 = vmatprep.mubr.f32.mxu0 0.0
    %959 = vmatmul.mubr.f32.gmra.mrb[0].mxu0 %v886
    %v960 = vpop.f32.mrb[0].mxu0
    %v961 = vadd.f32 %v877, %v960
    %v962 = vpop.f32.mrb[0].mxu0
    %v963 = vadd.f32 %v881, %v962
    %964 = vdwg.mxu0
    %v965 = vmax.f32 %v961, 0.0
    %v966 = vmax.f32 %v963, 0.0
    %v967 = vld [vmem:[%s9] sm:$0xff]
    %v968 = vld [vmem:[%s9 + $0x8] sm:$0xff]
    %v969 = vld [vmem:[%s9 + $0x10] sm:$0xff]
    %v970 = vld [vmem:[%s9 + $0x18] sm:$0xff]
    %v971 = vld [vmem:[%s9 + $0x20] sm:$0xff]
    %v972 = vld [vmem:[%s9 + $0x28] sm:$0xff]
    %v973 = vld [vmem:[%s9 + $0x30] sm:$0xff]
    %v974 = vld [vmem:[%s9 + $0x38] sm:$0xff]
    %v975 = vld [vmem:[%s9 + $0x40] sm:$0xff]
    %v976 = vld [vmem:[%s9 + $0x48] sm:$0xff]
    %v977 = vld [vmem:[%s9 + $0x50] sm:$0xff]
    %v978 = vld [vmem:[%s9 + $0x58] sm:$0xff]
    %v979 = vld [vmem:[%s9 + $0x60] sm:$0xff]
    %v980 = vld [vmem:[%s9 + $0x68] sm:$0xff]
    %v981 = vld [vmem:[%s9 + $0x70] sm:$0xff]
    %v982 = vld [vmem:[%s9 + $0x78] sm:$0xff]
    %v983 = vld [vmem:[%s9 + $0x80] sm:$0xff]
    %v984 = vld [vmem:[%s9 + $0x88] sm:$0xff]
    %v985 = vld [vmem:[%s9 + $0x90] sm:$0xff]
    %v986 = vld [vmem:[%s9 + $0x98] sm:$0xff]
    %v987 = vld [vmem:[%s9 + $0xa0] sm:$0xff]
    %v988 = vld [vmem:[%s9 + $0xa8] sm:$0xff]
    %v989 = vld [vmem:[%s9 + $0xb0] sm:$0xff]
    %v990 = vld [vmem:[%s9 + $0xb8] sm:$0xff]
    %v991 = vld [vmem:[%s9 + $0xc0] sm:$0xff]
    %v992 = vld [vmem:[%s9 + $0xc8] sm:$0xff]
    %v993 = vld [vmem:[%s9 + $0xd0] sm:$0xff]
    %v994 = vld [vmem:[%s9 + $0xd8] sm:$0xff]
    %v995 = vld [vmem:[%s9 + $0xe0] sm:$0xff]
    %v996 = vld [vmem:[%s9 + $0xe8] sm:$0xff]
    %v997 = vld [vmem:[%s9 + $0xf0] sm:$0xff]
    %v998 = vld [vmem:[%s9 + $0xf8] sm:$0xff]
    %v999 = vld [vmem:[%s9 + $0x100] sm:$0xff]
    %v1000 = vld [vmem:[%s9 + $0x108] sm:$0xff]
    %v1001 = vld [vmem:[%s9 + $0x110] sm:$0xff]
    %v1002 = vld [vmem:[%s9 + $0x118] sm:$0xff]
    %v1003 = vld [vmem:[%s9 + $0x120] sm:$0xff]
    %v1004 = vld [vmem:[%s9 + $0x128] sm:$0xff]
    %v1005 = vld [vmem:[%s9 + $0x130] sm:$0xff]
    %v1006 = vld [vmem:[%s9 + $0x138] sm:$0xff]
    %v1007 = vld [vmem:[%s9 + $0x140] sm:$0xff]
    %v1008 = vld [vmem:[%s9 + $0x148] sm:$0xff]
    %v1009 = vld [vmem:[%s9 + $0x150] sm:$0xff]
    %v1010 = vld [vmem:[%s9 + $0x158] sm:$0xff]
    %v1011 = vld [vmem:[%s9 + $0x160] sm:$0xff]
    %v1012 = vld [vmem:[%s9 + $0x168] sm:$0xff]
    %v1013 = vld [vmem:[%s9 + $0x170] sm:$0xff]
    %v1014 = vld [vmem:[%s9 + $0x178] sm:$0xff]
    %v1015 = vld [vmem:[%s9 + $0x180] sm:$0xff]
    %v1016 = vld [vmem:[%s9 + $0x188] sm:$0xff]
    %v1017 = vld [vmem:[%s9 + $0x190] sm:$0xff]
    %v1018 = vld [vmem:[%s9 + $0x198] sm:$0xff]
    %v1019 = vld [vmem:[%s9 + $0x1a0] sm:$0xff]
    %v1020 = vld [vmem:[%s9 + $0x1a8] sm:$0xff]
    %v1021 = vld [vmem:[%s9 + $0x1b0] sm:$0xff]
    %v1022 = vld [vmem:[%s9 + $0x1b8] sm:$0xff]
    %v1023 = vld [vmem:[%s9 + $0x1c0] sm:$0xff]
    %v1024 = vld [vmem:[%s9 + $0x1c8] sm:$0xff]
    %v1025 = vld [vmem:[%s9 + $0x1d0] sm:$0xff]
    %v1026 = vld [vmem:[%s9 + $0x1d8] sm:$0xff]
    %v1027 = vld [vmem:[%s9 + $0x1e0] sm:$0xff]
    %v1028 = vld [vmem:[%s9 + $0x1e8] sm:$0xff]
    %v1029 = vld [vmem:[%s9 + $0x1f0] sm:$0xff]
    %v1030 = vld [vmem:[%s9 + $0x1f8] sm:$0xff]
    %v1031 = vld [vmem:[#allocation7] sm:$0x3]
    %v1033 = vlaneseq
    %v1034 = vshrl.u32 %v1033, 7
    %v1035 = vsub.s32 0, %v1034
    %v1036 = vrot.slane %v1031, %v1035
    %v1037 = vlaneseq
    %v1038 = vshrl.u32 %v1037, 7
    %v1039 = vsub.s32 1, %v1038
    %v1040 = vrot.slane %v1031, %v1039
    %1043 = vmatprep.subr.mxu0 %v968
    %1044 = vmatpush1.msra.mxu0 %v967
    %1045 = vmatprep.subr.mxu0 %v970
    %1046 = vmatpush1.msra.mxu0 %v969
    %1047 = vmatprep.subr.mxu0 %v972
    %1048 = vmatpush1.msra.mxu0 %v971
    %1049 = vmatprep.subr.mxu0 %v974
    %1050 = vmatpush1.msra.mxu0 %v973
    %1051 = vmatprep.subr.mxu0 %v976
    %1052 = vmatpush1.msra.mxu0 %v975
    %1053 = vmatprep.subr.mxu0 %v978
    %1054 = vmatpush1.msra.mxu0 %v977
    %1055 = vmatprep.subr.mxu0 %v980
    %1056 = vmatpush1.msra.mxu0 %v979
    %1057 = vmatprep.subr.mxu0 %v982
    %1058 = vmatpush1.msra.mxu0 %v981
    %1059 = vmatprep.subr.mxu0 %v984
    %1060 = vmatpush1.msra.mxu0 %v983
    %1061 = vmatprep.subr.mxu0 %v986
    %1062 = vmatpush1.msra.mxu0 %v985
    %1063 = vmatprep.subr.mxu0 %v988
    %1064 = vmatpush1.msra.mxu0 %v987
    %1065 = vmatprep.subr.mxu0 %v990
    %1066 = vmatpush1.msra.mxu0 %v989
    %1067 = vmatprep.subr.mxu0 %v992
    %1068 = vmatpush1.msra.mxu0 %v991
    %1069 = vmatprep.subr.mxu0 %v994
    %1070 = vmatpush1.msra.mxu0 %v993
    %1071 = vmatprep.subr.mxu0 %v996
    %1072 = vmatpush1.msra.mxu0 %v995
    %1073 = vmatprep.subr.mxu0 %v998
    %1074 = vmatpush1.msra.mxu0 %v997
    %1075 = vmatprep.subr.mxu0 %v1000
    %1076 = vmatpush1.msra.mxu0 %v999
    %1077 = vmatprep.subr.mxu0 %v1002
    %1078 = vmatpush1.msra.mxu0 %v1001
    %1079 = vmatprep.subr.mxu0 %v1004
    %1080 = vmatpush1.msra.mxu0 %v1003
    %1081 = vmatprep.subr.mxu0 %v1006
    %1082 = vmatpush1.msra.mxu0 %v1005
    %1083 = vmatprep.subr.mxu0 %v1008
    %1084 = vmatpush1.msra.mxu0 %v1007
    %1085 = vmatprep.subr.mxu0 %v1010
    %1086 = vmatpush1.msra.mxu0 %v1009
    %1087 = vmatprep.subr.mxu0 %v1012
    %1088 = vmatpush1.msra.mxu0 %v1011
    %1089 = vmatprep.subr.mxu0 %v1014
    %1090 = vmatpush1.msra.mxu0 %v1013
    %1091 = vmatprep.subr.mxu0 %v1016
    %1092 = vmatpush1.msra.mxu0 %v1015
    %1093 = vmatprep.subr.mxu0 %v1018
    %1094 = vmatpush1.msra.mxu0 %v1017
    %1095 = vmatprep.subr.mxu0 %v1020
    %1096 = vmatpush1.msra.mxu0 %v1019
    %1097 = vmatprep.subr.mxu0 %v1022
    %1098 = vmatpush1.msra.mxu0 %v1021
    %1099 = vmatprep.subr.mxu0 %v1024
    %1100 = vmatpush1.msra.mxu0 %v1023
    %1101 = vmatprep.subr.mxu0 %v1026
    %1102 = vmatpush1.msra.mxu0 %v1025
    %1103 = vmatprep.subr.mxu0 %v1028
    %1104 = vmatpush1.msra.mxu0 %v1027
    %1105 = vmatprep.subr.mxu0 %v1030
    %1106 = vmatpush1.msra.mxu0 %v1029
    %1107 = vmatprep.mubr.f32.mxu0 %v966
    %1108 = vmatmul.mubr.f32.gmra.mrb[0].mxu0 %v965
    %v1109 = vpop.f32.mrb[0].mxu0
    %v1110 = vadd.f32 %v1036, %v1109
    %v1111 = vpop.f32.mrb[0].mxu0
    %v1112 = vadd.f32 %v1040, %v1111
    %1113 = vdwg.mxu0
    %v1114 = vmax.f32 %v1110, 0.0
    %v1115 = vmax.f32 %v1112, 0.0
    %v1116 = vld [vmem:[%s11] sm:$0xff]
    %v1117 = vld [vmem:[%s11 + $0x8] sm:$0xff]
    %v1118 = vld [vmem:[%s11 + $0x10] sm:$0xff]
    %v1119 = vld [vmem:[%s11 + $0x18] sm:$0xff]
    %v1120 = vld [vmem:[%s11 + $0x20] sm:$0xff]
    %v1121 = vld [vmem:[%s11 + $0x28] sm:$0xff]
    %v1122 = vld [vmem:[%s11 + $0x30] sm:$0xff]
    %v1123 = vld [vmem:[%s11 + $0x38] sm:$0xff]
    %v1124 = vld [vmem:[%s11 + $0x40] sm:$0xff]
    %v1125 = vld [vmem:[%s11 + $0x48] sm:$0xff]
    %v1126 = vld [vmem:[%s11 + $0x50] sm:$0xff]
    %v1127 = vld [vmem:[%s11 + $0x58] sm:$0xff]
    %v1128 = vld [vmem:[%s11 + $0x60] sm:$0xff]
    %v1129 = vld [vmem:[%s11 + $0x68] sm:$0xff]
    %v1130 = vld [vmem:[%s11 + $0x70] sm:$0xff]
    %v1131 = vld [vmem:[%s11 + $0x78] sm:$0xff]
    %v1132 = vld [vmem:[%s11 + $0x80] sm:$0xff]
    %v1133 = vld [vmem:[%s11 + $0x88] sm:$0xff]
    %v1134 = vld [vmem:[%s11 + $0x90] sm:$0xff]
    %v1135 = vld [vmem:[%s11 + $0x98] sm:$0xff]
    %v1136 = vld [vmem:[%s11 + $0xa0] sm:$0xff]
    %v1137 = vld [vmem:[%s11 + $0xa8] sm:$0xff]
    %v1138 = vld [vmem:[%s11 + $0xb0] sm:$0xff]
    %v1139 = vld [vmem:[%s11 + $0xb8] sm:$0xff]
    %v1140 = vld [vmem:[%s11 + $0xc0] sm:$0xff]
    %v1141 = vld [vmem:[%s11 + $0xc8] sm:$0xff]
    %v1142 = vld [vmem:[%s11 + $0xd0] sm:$0xff]
    %v1143 = vld [vmem:[%s11 + $0xd8] sm:$0xff]
    %v1144 = vld [vmem:[%s11 + $0xe0] sm:$0xff]
    %v1145 = vld [vmem:[%s11 + $0xe8] sm:$0xff]
    %v1146 = vld [vmem:[%s11 + $0xf0] sm:$0xff]
    %v1147 = vld [vmem:[%s11 + $0xf8] sm:$0xff]
    %v1148 = vld [vmem:[%s11 + $0x100] sm:$0xff]
    %v1149 = vld [vmem:[%s11 + $0x108] sm:$0xff]
    %v1150 = vld [vmem:[%s11 + $0x110] sm:$0xff]
    %v1151 = vld [vmem:[%s11 + $0x118] sm:$0xff]
    %v1152 = vld [vmem:[%s11 + $0x120] sm:$0xff]
    %v1153 = vld [vmem:[%s11 + $0x128] sm:$0xff]
    %v1154 = vld [vmem:[%s11 + $0x130] sm:$0xff]
    %v1155 = vld [vmem:[%s11 + $0x138] sm:$0xff]
    %v1156 = vld [vmem:[%s11 + $0x140] sm:$0xff]
    %v1157 = vld [vmem:[%s11 + $0x148] sm:$0xff]
    %v1158 = vld [vmem:[%s11 + $0x150] sm:$0xff]
    %v1159 = vld [vmem:[%s11 + $0x158] sm:$0xff]
    %v1160 = vld [vmem:[%s11 + $0x160] sm:$0xff]
    %v1161 = vld [vmem:[%s11 + $0x168] sm:$0xff]
    %v1162 = vld [vmem:[%s11 + $0x170] sm:$0xff]
    %v1163 = vld [vmem:[%s11 + $0x178] sm:$0xff]
    %v1164 = vld [vmem:[%s11 + $0x180] sm:$0xff]
    %v1165 = vld [vmem:[%s11 + $0x188] sm:$0xff]
    %v1166 = vld [vmem:[%s11 + $0x190] sm:$0xff]
    %v1167 = vld [vmem:[%s11 + $0x198] sm:$0xff]
    %v1168 = vld [vmem:[%s11 + $0x1a0] sm:$0xff]
    %v1169 = vld [vmem:[%s11 + $0x1a8] sm:$0xff]
    %v1170 = vld [vmem:[%s11 + $0x1b0] sm:$0xff]
    %v1171 = vld [vmem:[%s11 + $0x1b8] sm:$0xff]
    %v1172 = vld [vmem:[%s11 + $0x1c0] sm:$0xff]
    %v1173 = vld [vmem:[%s11 + $0x1c8] sm:$0xff]
    %v1174 = vld [vmem:[%s11 + $0x1d0] sm:$0xff]
    %v1175 = vld [vmem:[%s11 + $0x1d8] sm:$0xff]
    %v1176 = vld [vmem:[%s11 + $0x1e0] sm:$0xff]
    %v1177 = vld [vmem:[%s11 + $0x1e8] sm:$0xff]
    %v1178 = vld [vmem:[%s11 + $0x1f0] sm:$0xff]
    %v1179 = vld [vmem:[%s11 + $0x1f8] sm:$0xff]
    %v1180 = vld [vmem:[#allocation9] sm:$0x3]
    %v1182 = vlaneseq
    %v1183 = vshrl.u32 %v1182, 7
    %v1184 = vsub.s32 0, %v1183
    %v1185 = vrot.slane %v1180, %v1184
    %v1186 = vlaneseq
    %v1187 = vshrl.u32 %v1186, 7
    %v1188 = vsub.s32 1, %v1187
    %v1189 = vrot.slane %v1180, %v1188
    %1192 = vmatprep.subr.mxu0 %v1117
    %1193 = vmatpush1.msra.mxu0 %v1116
    %1194 = vmatprep.subr.mxu0 %v1119
    %1195 = vmatpush1.msra.mxu0 %v1118
    %1196 = vmatprep.subr.mxu0 %v1121
    %1197 = vmatpush1.msra.mxu0 %v1120
    %1198 = vmatprep.subr.mxu0 %v1123
    %1199 = vmatpush1.msra.mxu0 %v1122
    %1200 = vmatprep.subr.mxu0 %v1125
    %1201 = vmatpush1.msra.mxu0 %v1124
    %1202 = vmatprep.subr.mxu0 %v1127
    %1203 = vmatpush1.msra.mxu0 %v1126
    %1204 = vmatprep.subr.mxu0 %v1129
    %1205 = vmatpush1.msra.mxu0 %v1128
    %1206 = vmatprep.subr.mxu0 %v1131
    %1207 = vmatpush1.msra.mxu0 %v1130
    %1208 = vmatprep.subr.mxu0 %v1133
    %1209 = vmatpush1.msra.mxu0 %v1132
    %1210 = vmatprep.subr.mxu0 %v1135
    %1211 = vmatpush1.msra.mxu0 %v1134
    %1212 = vmatprep.subr.mxu0 %v1137
    %1213 = vmatpush1.msra.mxu0 %v1136
    %1214 = vmatprep.subr.mxu0 %v1139
    %1215 = vmatpush1.msra.mxu0 %v1138
    %1216 = vmatprep.subr.mxu0 %v1141
    %1217 = vmatpush1.msra.mxu0 %v1140
    %1218 = vmatprep.subr.mxu0 %v1143
    %1219 = vmatpush1.msra.mxu0 %v1142
    %1220 = vmatprep.subr.mxu0 %v1145
    %1221 = vmatpush1.msra.mxu0 %v1144
    %1222 = vmatprep.subr.mxu0 %v1147
    %1223 = vmatpush1.msra.mxu0 %v1146
    %1224 = vmatprep.subr.mxu0 %v1149
    %1225 = vmatpush1.msra.mxu0 %v1148
    %1226 = vmatprep.subr.mxu0 %v1151
    %1227 = vmatpush1.msra.mxu0 %v1150
    %1228 = vmatprep.subr.mxu0 %v1153
    %1229 = vmatpush1.msra.mxu0 %v1152
    %1230 = vmatprep.subr.mxu0 %v1155
    %1231 = vmatpush1.msra.mxu0 %v1154
    %1232 = vmatprep.subr.mxu0 %v1157
    %1233 = vmatpush1.msra.mxu0 %v1156
    %1234 = vmatprep.subr.mxu0 %v1159
    %1235 = vmatpush1.msra.mxu0 %v1158
    %1236 = vmatprep.subr.mxu0 %v1161
    %1237 = vmatpush1.msra.mxu0 %v1160
    %1238 = vmatprep.subr.mxu0 %v1163
    %1239 = vmatpush1.msra.mxu0 %v1162
    %1240 = vmatprep.subr.mxu0 %v1165
    %1241 = vmatpush1.msra.mxu0 %v1164
    %1242 = vmatprep.subr.mxu0 %v1167
    %1243 = vmatpush1.msra.mxu0 %v1166
    %1244 = vmatprep.subr.mxu0 %v1169
    %1245 = vmatpush1.msra.mxu0 %v1168
    %1246 = vmatprep.subr.mxu0 %v1171
    %1247 = vmatpush1.msra.mxu0 %v1170
    %1248 = vmatprep.subr.mxu0 %v1173
    %1249 = vmatpush1.msra.mxu0 %v1172
    %1250 = vmatprep.subr.mxu0 %v1175
    %1251 = vmatpush1.msra.mxu0 %v1174
    %1252 = vmatprep.subr.mxu0 %v1177
    %1253 = vmatpush1.msra.mxu0 %v1176
    %1254 = vmatprep.subr.mxu0 %v1179
    %1255 = vmatpush1.msra.mxu0 %v1178
    %1256 = vmatprep.mubr.f32.mxu0 %v1115
    %1257 = vmatmul.mubr.f32.gmra.mrb[0].mxu0 %v1114
    %v1258 = vpop.f32.mrb[0].mxu0
    %v1259 = vadd.f32 %v1185, %v1258
    %v1260 = vpop.f32.mrb[0].mxu0
    %v1261 = vadd.f32 %v1189, %v1260
    %1262 = vdwg.mxu0
    %v1263 = vmax.f32 %v1259, 0.0
    %v1264 = vmax.f32 %v1261, 0.0
    %v1265 = vld [vmem:[%s13] sm:$0x3]
    %v1266 = vld [vmem:[#allocation10] sm:$0xff]
    %v1267 = vld [vmem:[#allocation10 + $0x8] sm:$0xff]
    %v1268 = vld [vmem:[#allocation10 + $0x10] sm:$0xff]
    %v1269 = vld [vmem:[#allocation10 + $0x18] sm:$0xff]
    %v1270 = vld [vmem:[#allocation10 + $0x20] sm:$0xff]
    %v1271 = vld [vmem:[#allocation10 + $0x28] sm:$0xff]
    %v1272 = vld [vmem:[#allocation10 + $0x30] sm:$0xff]
    %v1273 = vld [vmem:[#allocation10 + $0x38] sm:$0xff]
    %v1274 = vld [vmem:[#allocation10 + $0x40] sm:$0xff]
    %v1275 = vld [vmem:[#allocation10 + $0x48] sm:$0xff]
    %v1276 = vld [vmem:[#allocation10 + $0x50] sm:$0xff]
    %v1277 = vld [vmem:[#allocation10 + $0x58] sm:$0xff]
    %v1278 = vld [vmem:[#allocation10 + $0x60] sm:$0xff]
    %v1279 = vld [vmem:[#allocation10 + $0x68] sm:$0xff]
    %v1280 = vld [vmem:[#allocation10 + $0x70] sm:$0xff]
    %v1281 = vld [vmem:[#allocation10 + $0x78] sm:$0xff]
    %v1282 = vld [vmem:[#allocation10 + $0x80] sm:$0xff]
    %v1283 = vld [vmem:[#allocation10 + $0x88] sm:$0xff]
    %v1284 = vld [vmem:[#allocation10 + $0x90] sm:$0xff]
    %v1285 = vld [vmem:[#allocation10 + $0x98] sm:$0xff]
    %v1286 = vld [vmem:[#allocation10 + $0xa0] sm:$0xff]
    %v1287 = vld [vmem:[#allocation10 + $0xa8] sm:$0xff]
    %v1288 = vld [vmem:[#allocation10 + $0xb0] sm:$0xff]
    %v1289 = vld [vmem:[#allocation10 + $0xb8] sm:$0xff]
    %v1290 = vld [vmem:[%s15] sm:$0xff]
    %v1291 = vld [vmem:[%s15 + $0x8] sm:$0xff]
    %v1292 = vld [vmem:[%s15 + $0x10] sm:$0xff]
    %v1293 = vld [vmem:[%s15 + $0x18] sm:$0xff]
    %v1294 = vld [vmem:[%s15 + $0x20] sm:$0xff]
    %v1295 = vld [vmem:[%s15 + $0x28] sm:$0xff]
    %v1296 = vld [vmem:[%s15 + $0x30] sm:$0xff]
    %v1297 = vld [vmem:[%s15 + $0x38] sm:$0xff]
    %vm1300 = vcmask 1041409
    %v1301 = vsel %vm1300, %v858, %v851
    %v1302 = vsel %vm386, %v1301, 0
    %1304 = vmatprep.subr.mxu0 %v1291
    %1305 = vmatpush1.msra.mxu0 %v1290
    %1306 = vmatprep.subr.mxu0 %v1293
    %1307 = vmatpush1.msra.mxu0 %v1292
    %1308 = vmatprep.subr.mxu0 %v1295
    %1309 = vmatpush1.msra.mxu0 %v1294
    %1310 = vmatprep.subr.mxu0 %v1297
    %1311 = vmatpush1.msra.mxu0 %v1296
    %1312 = vmatprep.subr.mxu0 0.0
    %1313 = vmatpush1.msra.mxu0 0.0
    %1314 = vmatprep.subr.mxu0 0.0
    %1315 = vmatpush1.msra.mxu0 0.0
    %1316 = vmatprep.subr.mxu0 0.0
    %1317 = vmatpush1.msra.mxu0 0.0
    %1318 = vmatprep.subr.mxu0 0.0
    %1319 = vmatpush1.msra.mxu0 0.0
    %1320 = vmatprep.subr.mxu0 0.0
    %1321 = vmatpush1.msra.mxu0 0.0
    %1322 = vmatprep.subr.mxu0 0.0
    %1323 = vmatpush1.msra.mxu0 0.0
    %1324 = vmatprep.subr.mxu0 0.0
    %1325 = vmatpush1.msra.mxu0 0.0
    %1326 = vmatprep.subr.mxu0 0.0
    %1327 = vmatpush1.msra.mxu0 0.0
    %1328 = vmatprep.subr.mxu0 0.0
    %1329 = vmatpush1.msra.mxu0 0.0
    %1330 = vmatprep.subr.mxu0 0.0
    %1331 = vmatpush1.msra.mxu0 0.0
    %1332 = vmatprep.subr.mxu0 0.0
    %1333 = vmatpush1.msra.mxu0 0.0
    %1334 = vmatprep.subr.mxu0 0.0
    %1335 = vmatpush1.msra.mxu0 0.0
    %1336 = vmatprep.subr.mxu0 0.0
    %1337 = vmatpush1.msra.mxu0 0.0
    %1338 = vmatprep.subr.mxu0 0.0
    %1339 = vmatpush1.msra.mxu0 0.0
    %1340 = vmatprep.subr.mxu0 0.0
    %1341 = vmatpush1.msra.mxu0 0.0
    %1342 = vmatprep.subr.mxu0 0.0
    %1343 = vmatpush1.msra.mxu0 0.0
    %1344 = vmatprep.subr.mxu0 0.0
    %1345 = vmatpush1.msra.mxu0 0.0
    %1346 = vmatprep.subr.mxu0 0.0
    %1347 = vmatpush1.msra.mxu0 0.0
    %1348 = vmatprep.subr.mxu0 0.0
    %1349 = vmatpush1.msra.mxu0 0.0
    %1350 = vmatprep.subr.mxu0 0.0
    %1351 = vmatpush1.msra.mxu0 0.0
    %1352 = vmatprep.subr.mxu0 0.0
    %1353 = vmatpush1.msra.mxu0 0.0
    %1354 = vmatprep.subr.mxu0 0.0
    %1355 = vmatpush1.msra.mxu0 0.0
    %1356 = vmatprep.subr.mxu0 0.0
    %1357 = vmatpush1.msra.mxu0 0.0
    %1358 = vmatprep.subr.mxu0 0.0
    %1359 = vmatpush1.msra.mxu0 0.0
    %1360 = vmatprep.subr.mxu0 0.0
    %1361 = vmatpush1.msra.mxu0 0.0
    %1362 = vmatprep.subr.mxu0 0.0
    %1363 = vmatpush1.msra.mxu0 0.0
    %1364 = vmatprep.subr.mxu0 0.0
    %1365 = vmatpush1.msra.mxu0 0.0
    %1366 = vmatprep.subr.mxu0 0.0
    %1367 = vmatpush1.msra.mxu0 0.0
    %1368 = vmatprep.mubr.f32.mxu0 0.0
    %1369 = vmatmul.mubr.f32.gmra.mrb[0].mxu0 %v1302
    %v1370 = vpop.f32.mrb[0].mxu0
    %v1371 = vadd.f32 0.0, %v1370
    %v1372 = vpop.f32.mrb[0].mxu0
    %v1373 = vadd.f32 0.0, %v1372
    %1374 = vdwg.mxu0
    %v1376 = vsel %vm392, %v1265, 0
    %1378 = vmatprep.subr.mxu0 %v1267
    %1379 = vmatpush1.msra.mxu0 %v1266
    %1380 = vmatprep.subr.mxu0 %v1269
    %1381 = vmatpush1.msra.mxu0 %v1268
    %1382 = vmatprep.subr.mxu0 %v1271
    %1383 = vmatpush1.msra.mxu0 %v1270
    %1384 = vmatprep.subr.mxu0 %v1273
    %1385 = vmatpush1.msra.mxu0 %v1272
    %1386 = vmatprep.subr.mxu0 %v1275
    %1387 = vmatpush1.msra.mxu0 %v1274
    %1388 = vmatprep.subr.mxu0 %v1277
    %1389 = vmatpush1.msra.mxu0 %v1276
    %1390 = vmatprep.subr.mxu0 %v1279
    %1391 = vmatpush1.msra.mxu0 %v1278
    %1392 = vmatprep.subr.mxu0 %v1281
    %1393 = vmatpush1.msra.mxu0 %v1280
    %1394 = vmatprep.subr.mxu0 %v1283
    %1395 = vmatpush1.msra.mxu0 %v1282
    %1396 = vmatprep.subr.mxu0 %v1285
    %1397 = vmatpush1.msra.mxu0 %v1284
    %1398 = vmatprep.subr.mxu0 %v1287
    %1399 = vmatpush1.msra.mxu0 %v1286
    %1400 = vmatprep.subr.mxu0 %v1289
    %1401 = vmatpush1.msra.mxu0 %v1288
    %1402 = vmatprep.subr.mxu0 0.0
    %1403 = vmatpush1.msra.mxu0 0.0
    %1404 = vmatprep.subr.mxu0 0.0
    %1405 = vmatpush1.msra.mxu0 0.0
    %1406 = vmatprep.subr.mxu0 0.0
    %1407 = vmatpush1.msra.mxu0 0.0
    %1408 = vmatprep.subr.mxu0 0.0
    %1409 = vmatpush1.msra.mxu0 0.0
    %1410 = vmatprep.subr.mxu0 0.0
    %1411 = vmatpush1.msra.mxu0 0.0
    %1412 = vmatprep.subr.mxu0 0.0
    %1413 = vmatpush1.msra.mxu0 0.0
    %1414 = vmatprep.subr.mxu0 0.0
    %1415 = vmatpush1.msra.mxu0 0.0
    %1416 = vmatprep.subr.mxu0 0.0
    %1417 = vmatpush1.msra.mxu0 0.0
    %1418 = vmatprep.subr.mxu0 0.0
    %1419 = vmatpush1.msra.mxu0 0.0
    %1420 = vmatprep.subr.mxu0 0.0
    %1421 = vmatpush1.msra.mxu0 0.0
    %1422 = vmatprep.subr.mxu0 0.0
    %1423 = vmatpush1.msra.mxu0 0.0
    %1424 = vmatprep.subr.mxu0 0.0
    %1425 = vmatpush1.msra.mxu0 0.0
    %1426 = vmatprep.subr.mxu0 0.0
    %1427 = vmatpush1.msra.mxu0 0.0
    %1428 = vmatprep.subr.mxu0 0.0
    %1429 = vmatpush1.msra.mxu0 0.0
    %1430 = vmatprep.subr.mxu0 0.0
    %1431 = vmatpush1.msra.mxu0 0.0
    %1432 = vmatprep.subr.mxu0 0.0
    %1433 = vmatpush1.msra.mxu0 0.0
    %1434 = vmatprep.subr.mxu0 0.0
    %1435 = vmatpush1.msra.mxu0 0.0
    %1436 = vmatprep.subr.mxu0 0.0
    %1437 = vmatpush1.msra.mxu0 0.0
    %1438 = vmatprep.subr.mxu0 0.0
    %1439 = vmatpush1.msra.mxu0 0.0
    %1440 = vmatprep.subr.mxu0 0.0
    %1441 = vmatpush1.msra.mxu0 0.0
    %1442 = vmatprep.mubr.f32.mxu0 0.0
    %1443 = vmatmul.mubr.f32.gmra.mrb[0].mxu0 %v1376
    %v1444 = vpop.f32.mrb[0].mxu0
    %v1445 = vadd.f32 %v1371, %v1444
    %v1446 = vpop.f32.mrb[0].mxu0
    %v1447 = vadd.f32 %v1373, %v1446
    %1448 = vdwg.mxu0
    %v1449 = vld [vmem:[#allocation12] sm:$0x3]
    %v1451 = vlaneseq
    %v1452 = vshrl.u32 %v1451, 7
    %v1453 = vsub.s32 0, %v1452
    %v1454 = vrot.slane %v1449, %v1453
    %v1455 = vlaneseq
    %v1456 = vshrl.u32 %v1455, 7
    %v1457 = vsub.s32 1, %v1456
    %v1458 = vrot.slane %v1449, %v1457
    %v1461 = vadd.f32 %v1445, %v1454
    %v1462 = vadd.f32 %v1447, %v1458
    %v1463 = vmax.f32 %v1461, 0.0
    %v1464 = vmax.f32 %v1462, 0.0
    %v1465 = vld [vmem:[#allocation13] sm:$0xff]
    %v1466 = vld [vmem:[#allocation13 + $0x8] sm:$0xff]
    %v1467 = vld [vmem:[#allocation13 + $0x10] sm:$0xff]
    %v1468 = vld [vmem:[#allocation13 + $0x18] sm:$0xff]
    %v1469 = vld [vmem:[#allocation13 + $0x20] sm:$0xff]
    %v1470 = vld [vmem:[#allocation13 + $0x28] sm:$0xff]
    %v1471 = vld [vmem:[#allocation13 + $0x30] sm:$0xff]
    %v1472 = vld [vmem:[#allocation13 + $0x38] sm:$0xff]
    %v1473 = vld [vmem:[#allocation13 + $0x40] sm:$0xff]
    %v1474 = vld [vmem:[#allocation13 + $0x48] sm:$0xff]
    %v1475 = vld [vmem:[#allocation13 + $0x50] sm:$0xff]
    %v1476 = vld [vmem:[#allocation13 + $0x58] sm:$0xff]
    %v1477 = vld [vmem:[#allocation13 + $0x60] sm:$0xff]
    %v1478 = vld [vmem:[#allocation13 + $0x68] sm:$0xff]
    %v1479 = vld [vmem:[#allocation13 + $0x70] sm:$0xff]
    %v1480 = vld [vmem:[#allocation13 + $0x78] sm:$0xff]
    %v1481 = vld [vmem:[#allocation13 + $0x80] sm:$0xff]
    %v1482 = vld [vmem:[#allocation13 + $0x88] sm:$0xff]
    %v1483 = vld [vmem:[#allocation13 + $0x90] sm:$0xff]
    %v1484 = vld [vmem:[#allocation13 + $0x98] sm:$0xff]
    %v1485 = vld [vmem:[#allocation13 + $0xa0] sm:$0xff]
    %v1486 = vld [vmem:[#allocation13 + $0xa8] sm:$0xff]
    %v1487 = vld [vmem:[#allocation13 + $0xb0] sm:$0xff]
    %v1488 = vld [vmem:[#allocation13 + $0xb8] sm:$0xff]
    %v1489 = vld [vmem:[#allocation13 + $0xc0] sm:$0xff]
    %v1490 = vld [vmem:[#allocation13 + $0xc8] sm:$0xff]
    %v1491 = vld [vmem:[#allocation13 + $0xd0] sm:$0xff]
    %v1492 = vld [vmem:[#allocation13 + $0xd8] sm:$0xff]
    %v1493 = vld [vmem:[#allocation13 + $0xe0] sm:$0xff]
    %v1494 = vld [vmem:[#allocation13 + $0xe8] sm:$0xff]
    %v1495 = vld [vmem:[#allocation13 + $0xf0] sm:$0xff]
    %v1496 = vld [vmem:[#allocation13 + $0xf8] sm:$0xff]
    %v1497 = vld [vmem:[#allocation13 + $0x100] sm:$0xff]
    %v1498 = vld [vmem:[#allocation13 + $0x108] sm:$0xff]
    %v1499 = vld [vmem:[#allocation13 + $0x110] sm:$0xff]
    %v1500 = vld [vmem:[#allocation13 + $0x118] sm:$0xff]
    %v1501 = vld [vmem:[#allocation13 + $0x120] sm:$0xff]
    %v1502 = vld [vmem:[#allocation13 + $0x128] sm:$0xff]
    %v1503 = vld [vmem:[#allocation13 + $0x130] sm:$0xff]
    %v1504 = vld [vmem:[#allocation13 + $0x138] sm:$0xff]
    %v1505 = vld [vmem:[#allocation13 + $0x140] sm:$0xff]
    %v1506 = vld [vmem:[#allocation13 + $0x148] sm:$0xff]
    %v1507 = vld [vmem:[#allocation13 + $0x150] sm:$0xff]
    %v1508 = vld [vmem:[#allocation13 + $0x158] sm:$0xff]
    %v1509 = vld [vmem:[#allocation13 + $0x160] sm:$0xff]
    %v1510 = vld [vmem:[#allocation13 + $0x168] sm:$0xff]
    %v1511 = vld [vmem:[#allocation13 + $0x170] sm:$0xff]
    %v1512 = vld [vmem:[#allocation13 + $0x178] sm:$0xff]
    %v1513 = vld [vmem:[#allocation13 + $0x180] sm:$0xff]
    %v1514 = vld [vmem:[#allocation13 + $0x188] sm:$0xff]
    %v1515 = vld [vmem:[#allocation13 + $0x190] sm:$0xff]
    %v1516 = vld [vmem:[#allocation13 + $0x198] sm:$0xff]
    %v1517 = vld [vmem:[#allocation13 + $0x1a0] sm:$0xff]
    %v1518 = vld [vmem:[#allocation13 + $0x1a8] sm:$0xff]
    %v1519 = vld [vmem:[#allocation13 + $0x1b0] sm:$0xff]
    %v1520 = vld [vmem:[#allocation13 + $0x1b8] sm:$0xff]
    %v1521 = vld [vmem:[#allocation13 + $0x1c0] sm:$0xff]
    %v1522 = vld [vmem:[#allocation13 + $0x1c8] sm:$0xff]
    %v1523 = vld [vmem:[#allocation13 + $0x1d0] sm:$0xff]
    %v1524 = vld [vmem:[#allocation13 + $0x1d8] sm:$0xff]
    %v1525 = vld [vmem:[#allocation13 + $0x1e0] sm:$0xff]
    %v1526 = vld [vmem:[#allocation13 + $0x1e8] sm:$0xff]
    %v1527 = vld [vmem:[#allocation13 + $0x1f0] sm:$0xff]
    %v1528 = vld [vmem:[#allocation13 + $0x1f8] sm:$0xff]
    %v1529 = vld [vmem:[#allocation15] sm:$0x3]
    %v1531 = vlaneseq
    %v1532 = vshrl.u32 %v1531, 7
    %v1533 = vsub.s32 0, %v1532
    %v1534 = vrot.slane %v1529, %v1533
    %v1535 = vlaneseq
    %v1536 = vshrl.u32 %v1535, 7
    %v1537 = vsub.s32 1, %v1536
    %v1538 = vrot.slane %v1529, %v1537
    %1541 = vmatprep.subr.mxu0 %v1466
    %1542 = vmatpush1.msra.mxu0 %v1465
    %1543 = vmatprep.subr.mxu0 %v1468
    %1544 = vmatpush1.msra.mxu0 %v1467
    %1545 = vmatprep.subr.mxu0 %v1470
    %1546 = vmatpush1.msra.mxu0 %v1469
    %1547 = vmatprep.subr.mxu0 %v1472
    %1548 = vmatpush1.msra.mxu0 %v1471
    %1549 = vmatprep.subr.mxu0 %v1474
    %1550 = vmatpush1.msra.mxu0 %v1473
    %1551 = vmatprep.subr.mxu0 %v1476
    %1552 = vmatpush1.msra.mxu0 %v1475
    %1553 = vmatprep.subr.mxu0 %v1478
    %1554 = vmatpush1.msra.mxu0 %v1477
    %1555 = vmatprep.subr.mxu0 %v1480
    %1556 = vmatpush1.msra.mxu0 %v1479
    %1557 = vmatprep.subr.mxu0 %v1482
    %1558 = vmatpush1.msra.mxu0 %v1481
    %1559 = vmatprep.subr.mxu0 %v1484
    %1560 = vmatpush1.msra.mxu0 %v1483
    %1561 = vmatprep.subr.mxu0 %v1486
    %1562 = vmatpush1.msra.mxu0 %v1485
    %1563 = vmatprep.subr.mxu0 %v1488
    %1564 = vmatpush1.msra.mxu0 %v1487
    %1565 = vmatprep.subr.mxu0 %v1490
    %1566 = vmatpush1.msra.mxu0 %v1489
    %1567 = vmatprep.subr.mxu0 %v1492
    %1568 = vmatpush1.msra.mxu0 %v1491
    %1569 = vmatprep.subr.mxu0 %v1494
    %1570 = vmatpush1.msra.mxu0 %v1493
    %1571 = vmatprep.subr.mxu0 %v1496
    %1572 = vmatpush1.msra.mxu0 %v1495
    %1573 = vmatprep.subr.mxu0 %v1498
    %1574 = vmatpush1.msra.mxu0 %v1497
    %1575 = vmatprep.subr.mxu0 %v1500
    %1576 = vmatpush1.msra.mxu0 %v1499
    %1577 = vmatprep.subr.mxu0 %v1502
    %1578 = vmatpush1.msra.mxu0 %v1501
    %1579 = vmatprep.subr.mxu0 %v1504
    %1580 = vmatpush1.msra.mxu0 %v1503
    %1581 = vmatprep.subr.mxu0 %v1506
    %1582 = vmatpush1.msra.mxu0 %v1505
    %1583 = vmatprep.subr.mxu0 %v1508
    %1584 = vmatpush1.msra.mxu0 %v1507
    %1585 = vmatprep.subr.mxu0 %v1510
    %1586 = vmatpush1.msra.mxu0 %v1509
    %1587 = vmatprep.subr.mxu0 %v1512
    %1588 = vmatpush1.msra.mxu0 %v1511
    %1589 = vmatprep.subr.mxu0 %v1514
    %1590 = vmatpush1.msra.mxu0 %v1513
    %1591 = vmatprep.subr.mxu0 %v1516
    %1592 = vmatpush1.msra.mxu0 %v1515
    %1593 = vmatprep.subr.mxu0 %v1518
    %1594 = vmatpush1.msra.mxu0 %v1517
    %1595 = vmatprep.subr.mxu0 %v1520
    %1596 = vmatpush1.msra.mxu0 %v1519
    %1597 = vmatprep.subr.mxu0 %v1522
    %1598 = vmatpush1.msra.mxu0 %v1521
    %1599 = vmatprep.subr.mxu0 %v1524
    %1600 = vmatpush1.msra.mxu0 %v1523
    %1601 = vmatprep.subr.mxu0 %v1526
    %1602 = vmatpush1.msra.mxu0 %v1525
    %1603 = vmatprep.subr.mxu0 %v1528
    %1604 = vmatpush1.msra.mxu0 %v1527
    %1605 = vmatprep.mubr.f32.mxu0 %v1464
    %1606 = vmatmul.mubr.f32.gmra.mrb[0].mxu0 %v1463
    %v1607 = vpop.f32.mrb[0].mxu0
    %v1608 = vadd.f32 %v1534, %v1607
    %v1609 = vpop.f32.mrb[0].mxu0
    %v1610 = vadd.f32 %v1538, %v1609
    %1611 = vdwg.mxu0
    %v1612 = vmax.f32 %v1608, 0.0
    %v1613 = vmax.f32 %v1610, 0.0
    %v1614 = vld [vmem:[%s19] sm:$0xff]
    %v1615 = vld [vmem:[%s19 + $0x8] sm:$0xff]
    %v1616 = vld [vmem:[%s19 + $0x10] sm:$0xff]
    %v1617 = vld [vmem:[%s19 + $0x18] sm:$0xff]
    %v1618 = vld [vmem:[%s19 + $0x20] sm:$0xff]
    %v1619 = vld [vmem:[%s19 + $0x28] sm:$0xff]
    %v1620 = vld [vmem:[%s19 + $0x30] sm:$0xff]
    %v1621 = vld [vmem:[%s19 + $0x38] sm:$0xff]
    %v1622 = vld [vmem:[%s19 + $0x40] sm:$0xff]
    %v1623 = vld [vmem:[%s19 + $0x48] sm:$0xff]
    %v1624 = vld [vmem:[%s19 + $0x50] sm:$0xff]
    %v1625 = vld [vmem:[%s19 + $0x58] sm:$0xff]
    %v1626 = vld [vmem:[%s19 + $0x60] sm:$0xff]
    %v1627 = vld [vmem:[%s19 + $0x68] sm:$0xff]
    %v1628 = vld [vmem:[%s19 + $0x70] sm:$0xff]
    %v1629 = vld [vmem:[%s19 + $0x78] sm:$0xff]
    %v1630 = vld [vmem:[%s19 + $0x80] sm:$0xff]
    %v1631 = vld [vmem:[%s19 + $0x88] sm:$0xff]
    %v1632 = vld [vmem:[%s19 + $0x90] sm:$0xff]
    %v1633 = vld [vmem:[%s19 + $0x98] sm:$0xff]
    %v1634 = vld [vmem:[%s19 + $0xa0] sm:$0xff]
    %v1635 = vld [vmem:[%s19 + $0xa8] sm:$0xff]
    %v1636 = vld [vmem:[%s19 + $0xb0] sm:$0xff]
    %v1637 = vld [vmem:[%s19 + $0xb8] sm:$0xff]
    %v1638 = vld [vmem:[%s19 + $0xc0] sm:$0xff]
    %v1639 = vld [vmem:[%s19 + $0xc8] sm:$0xff]
    %v1640 = vld [vmem:[%s19 + $0xd0] sm:$0xff]
    %v1641 = vld [vmem:[%s19 + $0xd8] sm:$0xff]
    %v1642 = vld [vmem:[%s19 + $0xe0] sm:$0xff]
    %v1643 = vld [vmem:[%s19 + $0xe8] sm:$0xff]
    %v1644 = vld [vmem:[%s19 + $0xf0] sm:$0xff]
    %v1645 = vld [vmem:[%s19 + $0xf8] sm:$0xff]
    %v1646 = vld [vmem:[%s20] sm:$0xff]
    %v1647 = vld [vmem:[%s20 + $0x8] sm:$0xff]
    %v1648 = vld [vmem:[%s20 + $0x10] sm:$0xff]
    %v1649 = vld [vmem:[%s20 + $0x18] sm:$0xff]
    %v1650 = vld [vmem:[%s20 + $0x20] sm:$0xff]
    %v1651 = vld [vmem:[%s20 + $0x28] sm:$0xff]
    %v1652 = vld [vmem:[%s20 + $0x30] sm:$0xff]
    %v1653 = vld [vmem:[%s20 + $0x38] sm:$0xff]
    %v1654 = vld [vmem:[%s20 + $0x40] sm:$0xff]
    %v1655 = vld [vmem:[%s20 + $0x48] sm:$0xff]
    %v1656 = vld [vmem:[%s20 + $0x50] sm:$0xff]
    %v1657 = vld [vmem:[%s20 + $0x58] sm:$0xff]
    %v1658 = vld [vmem:[%s20 + $0x60] sm:$0xff]
    %v1659 = vld [vmem:[%s20 + $0x68] sm:$0xff]
    %v1660 = vld [vmem:[%s20 + $0x70] sm:$0xff]
    %v1661 = vld [vmem:[%s20 + $0x78] sm:$0xff]
    %v1662 = vld [vmem:[%s20 + $0x80] sm:$0xff]
    %v1663 = vld [vmem:[%s20 + $0x88] sm:$0xff]
    %v1664 = vld [vmem:[%s20 + $0x90] sm:$0xff]
    %v1665 = vld [vmem:[%s20 + $0x98] sm:$0xff]
    %v1666 = vld [vmem:[%s20 + $0xa0] sm:$0xff]
    %v1667 = vld [vmem:[%s20 + $0xa8] sm:$0xff]
    %v1668 = vld [vmem:[%s20 + $0xb0] sm:$0xff]
    %v1669 = vld [vmem:[%s20 + $0xb8] sm:$0xff]
    %v1670 = vld [vmem:[%s20 + $0xc0] sm:$0xff]
    %v1671 = vld [vmem:[%s20 + $0xc8] sm:$0xff]
    %v1672 = vld [vmem:[%s20 + $0xd0] sm:$0xff]
    %v1673 = vld [vmem:[%s20 + $0xd8] sm:$0xff]
    %v1674 = vld [vmem:[%s20 + $0xe0] sm:$0xff]
    %v1675 = vld [vmem:[%s20 + $0xe8] sm:$0xff]
    %v1676 = vld [vmem:[%s20 + $0xf0] sm:$0xff]
    %v1677 = vld [vmem:[%s20 + $0xf8] sm:$0xff]
    %1678 = vmatprep.subr.mxu0 0.0
    %1679 = vmatpush1.msra.mxu0 %v1646
    %1680 = vmatprep.subr.mxu0 0.0
    %1681 = vmatpush1.msra.mxu0 %v1647
    %1682 = vmatprep.subr.mxu0 0.0
    %1683 = vmatpush1.msra.mxu0 %v1648
    %1684 = vmatprep.subr.mxu0 0.0
    %1685 = vmatpush1.msra.mxu0 %v1649
    %1686 = vmatprep.subr.mxu0 0.0
    %1687 = vmatpush1.msra.mxu0 %v1650
    %1688 = vmatprep.subr.mxu0 0.0
    %1689 = vmatpush1.msra.mxu0 %v1651
    %1690 = vmatprep.subr.mxu0 0.0
    %1691 = vmatpush1.msra.mxu0 %v1652
    %1692 = vmatprep.subr.mxu0 0.0
    %1693 = vmatpush1.msra.mxu0 %v1653
    %1694 = vmatprep.subr.mxu0 0.0
    %1695 = vmatpush1.msra.mxu0 %v1654
    %1696 = vmatprep.subr.mxu0 0.0
    %1697 = vmatpush1.msra.mxu0 %v1655
    %1698 = vmatprep.subr.mxu0 0.0
    %1699 = vmatpush1.msra.mxu0 %v1656
    %1700 = vmatprep.subr.mxu0 0.0
    %1701 = vmatpush1.msra.mxu0 %v1657
    %1702 = vmatprep.subr.mxu0 0.0
    %1703 = vmatpush1.msra.mxu0 %v1658
    %1704 = vmatprep.subr.mxu0 0.0
    %1705 = vmatpush1.msra.mxu0 %v1659
    %1706 = vmatprep.subr.mxu0 0.0
    %1707 = vmatpush1.msra.mxu0 %v1660
    %1708 = vmatprep.subr.mxu0 0.0
    %1709 = vmatpush1.msra.mxu0 %v1661
    %1710 = vmatprep.subr.mxu0 0.0
    %1711 = vmatpush1.msra.mxu0 %v1662
    %1712 = vmatprep.subr.mxu0 0.0
    %1713 = vmatpush1.msra.mxu0 %v1663
    %1714 = vmatprep.subr.mxu0 0.0
    %1715 = vmatpush1.msra.mxu0 %v1664
    %1716 = vmatprep.subr.mxu0 0.0
    %1717 = vmatpush1.msra.mxu0 %v1665
    %1718 = vmatprep.subr.mxu0 0.0
    %1719 = vmatpush1.msra.mxu0 %v1666
    %1720 = vmatprep.subr.mxu0 0.0
    %1721 = vmatpush1.msra.mxu0 %v1667
    %1722 = vmatprep.subr.mxu0 0.0
    %1723 = vmatpush1.msra.mxu0 %v1668
    %1724 = vmatprep.subr.mxu0 0.0
    %1725 = vmatpush1.msra.mxu0 %v1669
    %1726 = vmatprep.subr.mxu0 0.0
    %1727 = vmatpush1.msra.mxu0 %v1670
    %1728 = vmatprep.subr.mxu0 0.0
    %1729 = vmatpush1.msra.mxu0 %v1671
    %1730 = vmatprep.subr.mxu0 0.0
    %1731 = vmatpush1.msra.mxu0 %v1672
    %1732 = vmatprep.subr.mxu0 0.0
    %1733 = vmatpush1.msra.mxu0 %v1673
    %1734 = vmatprep.subr.mxu0 0.0
    %1735 = vmatpush1.msra.mxu0 %v1674
    %1736 = vmatprep.subr.mxu0 0.0
    %1737 = vmatpush1.msra.mxu0 %v1675
    %1738 = vmatprep.subr.mxu0 0.0
    %1739 = vmatpush1.msra.mxu0 %v1676
    %1740 = vmatprep.subr.mxu0 0.0
    %1741 = vmatpush1.msra.mxu0 %v1677
    %1742 = vmatprep.mubr.f32.mxu0 %v1613
    %1743 = vmatmul.mubr.f32.gmra.mrb[0].mxu0 %v1612
    %v1744 = vpop.f32.mrb[0].mxu0
    %v1745 = vadd.f32 0.0, %v1744
    %v1746 = vpop.f32.mrb[0].mxu0
    %1747 = vdwg.mxu0
    %1748 = vmatprep.subr.mxu0 0.0
    %1749 = vmatpush1.msra.mxu0 %v1614
    %1750 = vmatprep.subr.mxu0 0.0
    %1751 = vmatpush1.msra.mxu0 %v1615
    %1752 = vmatprep.subr.mxu0 0.0
    %1753 = vmatpush1.msra.mxu0 %v1616
    %1754 = vmatprep.subr.mxu0 0.0
    %1755 = vmatpush1.msra.mxu0 %v1617
    %1756 = vmatprep.subr.mxu0 0.0
    %1757 = vmatpush1.msra.mxu0 %v1618
    %1758 = vmatprep.subr.mxu0 0.0
    %1759 = vmatpush1.msra.mxu0 %v1619
    %1760 = vmatprep.subr.mxu0 0.0
    %1761 = vmatpush1.msra.mxu0 %v1620
    %1762 = vmatprep.subr.mxu0 0.0
    %1763 = vmatpush1.msra.mxu0 %v1621
    %1764 = vmatprep.subr.mxu0 0.0
    %1765 = vmatpush1.msra.mxu0 %v1622
    %1766 = vmatprep.subr.mxu0 0.0
    %1767 = vmatpush1.msra.mxu0 %v1623
    %1768 = vmatprep.subr.mxu0 0.0
    %1769 = vmatpush1.msra.mxu0 %v1624
    %1770 = vmatprep.subr.mxu0 0.0
    %1771 = vmatpush1.msra.mxu0 %v1625
    %1772 = vmatprep.subr.mxu0 0.0
    %1773 = vmatpush1.msra.mxu0 %v1626
    %1774 = vmatprep.subr.mxu0 0.0
    %1775 = vmatpush1.msra.mxu0 %v1627
    %1776 = vmatprep.subr.mxu0 0.0
    %1777 = vmatpush1.msra.mxu0 %v1628
    %1778 = vmatprep.subr.mxu0 0.0
    %1779 = vmatpush1.msra.mxu0 %v1629
    %1780 = vmatprep.subr.mxu0 0.0
    %1781 = vmatpush1.msra.mxu0 %v1630
    %1782 = vmatprep.subr.mxu0 0.0
    %1783 = vmatpush1.msra.mxu0 %v1631
    %1784 = vmatprep.subr.mxu0 0.0
    %1785 = vmatpush1.msra.mxu0 %v1632
    %1786 = vmatprep.subr.mxu0 0.0
    %1787 = vmatpush1.msra.mxu0 %v1633
    %1788 = vmatprep.subr.mxu0 0.0
    %1789 = vmatpush1.msra.mxu0 %v1634
    %1790 = vmatprep.subr.mxu0 0.0
    %1791 = vmatpush1.msra.mxu0 %v1635
    %1792 = vmatprep.subr.mxu0 0.0
    %1793 = vmatpush1.msra.mxu0 %v1636
    %1794 = vmatprep.subr.mxu0 0.0
    %1795 = vmatpush1.msra.mxu0 %v1637
    %1796 = vmatprep.subr.mxu0 0.0
    %1797 = vmatpush1.msra.mxu0 %v1638
    %1798 = vmatprep.subr.mxu0 0.0
    %1799 = vmatpush1.msra.mxu0 %v1639
    %1800 = vmatprep.subr.mxu0 0.0
    %1801 = vmatpush1.msra.mxu0 %v1640
    %1802 = vmatprep.subr.mxu0 0.0
    %1803 = vmatpush1.msra.mxu0 %v1641
    %1804 = vmatprep.subr.mxu0 0.0
    %1805 = vmatpush1.msra.mxu0 %v1642
    %1806 = vmatprep.subr.mxu0 0.0
    %1807 = vmatpush1.msra.mxu0 %v1643
    %1808 = vmatprep.subr.mxu0 0.0
    %1809 = vmatpush1.msra.mxu0 %v1644
    %1810 = vmatprep.subr.mxu0 0.0
    %1811 = vmatpush1.msra.mxu0 %v1645
    %1812 = vmatprep.mubr.f32.mxu0 %v1264
    %1813 = vmatmul.mubr.f32.gmra.mrb[0].mxu0 %v1263
    %v1814 = vpop.f32.mrb[0].mxu0
    %v1815 = vadd.f32 %v1745, %v1814
    %v1816 = vpop.f32.mrb[0].mxu0
    %1817 = vdwg.mxu0
    %v1818 = vld [vmem:[#allocation16] sm:$0x1]
    %v1820 = vlaneseq
    %v1821 = vshrl.u32 %v1820, 7
    %v1822 = vsub.s32 0, %v1821
    %v1823 = vrot.slane %v1818, %v1822
    %v1825 = vadd.f32 %v1815, %v1823
    %v1826 = vmax.f32 %v1825, 0.0
    %v1827 = vld [vmem:[%s22] sm:$0xff]
    %v1828 = vld [vmem:[%s22 + $0x8] sm:$0xff]
    %v1829 = vld [vmem:[%s22 + $0x10] sm:$0xff]
    %v1830 = vld [vmem:[%s22 + $0x18] sm:$0xff]
    %v1831 = vld [vmem:[%s22 + $0x20] sm:$0xff]
    %v1832 = vld [vmem:[%s22 + $0x28] sm:$0xff]
    %v1833 = vld [vmem:[%s22 + $0x30] sm:$0xff]
    %v1834 = vld [vmem:[%s22 + $0x38] sm:$0xff]
    %v1835 = vld [vmem:[%s22 + $0x40] sm:$0xff]
    %v1836 = vld [vmem:[%s22 + $0x48] sm:$0xff]
    %v1837 = vld [vmem:[%s22 + $0x50] sm:$0xff]
    %v1838 = vld [vmem:[%s22 + $0x58] sm:$0xff]
    %v1839 = vld [vmem:[%s22 + $0x60] sm:$0xff]
    %v1840 = vld [vmem:[%s22 + $0x68] sm:$0xff]
    %v1841 = vld [vmem:[%s22 + $0x70] sm:$0xff]
    %v1842 = vld [vmem:[%s22 + $0x78] sm:$0xff]
    %v1843 = vld [vmem:[#allocation18] sm:$0x1]
    %v1845 = vlaneseq
    %v1846 = vshrl.u32 %v1845, 7
    %v1847 = vsub.s32 0, %v1846
    %v1848 = vrot.slane %v1843, %v1847
    %1850 = vmatprep.subr.mxu0 0.0
    %1851 = vmatpush1.msra.mxu0 %v1827
    %1852 = vmatprep.subr.mxu0 0.0
    %1853 = vmatpush1.msra.mxu0 %v1828
    %1854 = vmatprep.subr.mxu0 0.0
    %1855 = vmatpush1.msra.mxu0 %v1829
    %1856 = vmatprep.subr.mxu0 0.0
    %1857 = vmatpush1.msra.mxu0 %v1830
    %1858 = vmatprep.subr.mxu0 0.0
    %1859 = vmatpush1.msra.mxu0 %v1831
    %1860 = vmatprep.subr.mxu0 0.0
    %1861 = vmatpush1.msra.mxu0 %v1832
    %1862 = vmatprep.subr.mxu0 0.0
    %1863 = vmatpush1.msra.mxu0 %v1833
    %1864 = vmatprep.subr.mxu0 0.0
    %1865 = vmatpush1.msra.mxu0 %v1834
    %1866 = vmatprep.subr.mxu0 0.0
    %1867 = vmatpush1.msra.mxu0 %v1835
    %1868 = vmatprep.subr.mxu0 0.0
    %1869 = vmatpush1.msra.mxu0 %v1836
    %1870 = vmatprep.subr.mxu0 0.0
    %1871 = vmatpush1.msra.mxu0 %v1837
    %1872 = vmatprep.subr.mxu0 0.0
    %1873 = vmatpush1.msra.mxu0 %v1838
    %1874 = vmatprep.subr.mxu0 0.0
    %1875 = vmatpush1.msra.mxu0 %v1839
    %1876 = vmatprep.subr.mxu0 0.0
    %1877 = vmatpush1.msra.mxu0 %v1840
    %1878 = vmatprep.subr.mxu0 0.0
    %1879 = vmatpush1.msra.mxu0 %v1841
    %1880 = vmatprep.subr.mxu0 0.0
    %1881 = vmatpush1.msra.mxu0 %v1842
    %1882 = vmatprep.subr.mxu0 0.0
    %1883 = vmatpush1.msra.mxu0 0.0
    %1884 = vmatprep.subr.mxu0 0.0
    %1885 = vmatpush1.msra.mxu0 0.0
    %1886 = vmatprep.subr.mxu0 0.0
    %1887 = vmatpush1.msra.mxu0 0.0
    %1888 = vmatprep.subr.mxu0 0.0
    %1889 = vmatpush1.msra.mxu0 0.0
    %1890 = vmatprep.subr.mxu0 0.0
    %1891 = vmatpush1.msra.mxu0 0.0
    %1892 = vmatprep.subr.mxu0 0.0
    %1893 = vmatpush1.msra.mxu0 0.0
    %1894 = vmatprep.subr.mxu0 0.0
    %1895 = vmatpush1.msra.mxu0 0.0
    %1896 = vmatprep.subr.mxu0 0.0
    %1897 = vmatpush1.msra.mxu0 0.0
    %1898 = vmatprep.subr.mxu0 0.0
    %1899 = vmatpush1.msra.mxu0 0.0
    %1900 = vmatprep.subr.mxu0 0.0
    %1901 = vmatpush1.msra.mxu0 0.0
    %1902 = vmatprep.subr.mxu0 0.0
    %1903 = vmatpush1.msra.mxu0 0.0
    %1904 = vmatprep.subr.mxu0 0.0
    %1905 = vmatpush1.msra.mxu0 0.0
    %1906 = vmatprep.subr.mxu0 0.0
    %1907 = vmatpush1.msra.mxu0 0.0
    %1908 = vmatprep.subr.mxu0 0.0
    %1909 = vmatpush1.msra.mxu0 0.0
    %1910 = vmatprep.subr.mxu0 0.0
    %1911 = vmatpush1.msra.mxu0 0.0
    %1912 = vmatprep.subr.mxu0 0.0
    %1913 = vmatpush1.msra.mxu0 0.0
    %1914 = vmatprep.mubr.f32.mxu0 0.0
    %1915 = vmatmul.mubr.f32.gmra.mrb[0].mxu0 %v1826
    %v1916 = vpop.f32.mrb[0].mxu0
    %v1917 = vadd.f32 %v1848, %v1916
    %v1918 = vpop.f32.mrb[0].mxu0
    %1919 = vdwg.mxu0
    %v1920 = vmax.f32 %v1917, 0.0
    %v1921 = vld [vmem:[%s24] sm:$0xff]
    %v1922 = vld [vmem:[%s24 + $0x8] sm:$0xff]
    %v1923 = vld [vmem:[%s24 + $0x10] sm:$0xff]
    %v1924 = vld [vmem:[%s24 + $0x18] sm:$0xff]
    %v1926 = vsel %vm386, %v1920, 0
    %1928 = vmatprep.subr.mxu0 0.0
    %1929 = vmatpush1.msra.mxu0 %v1921
    %1930 = vmatprep.subr.mxu0 0.0
    %1931 = vmatpush1.msra.mxu0 %v1922
    %1932 = vmatprep.subr.mxu0 0.0
    %1933 = vmatpush1.msra.mxu0 %v1923
    %1934 = vmatprep.subr.mxu0 0.0
    %1935 = vmatpush1.msra.mxu0 %v1924
    %1936 = vmatprep.subr.mxu0 0.0
    %1937 = vmatpush1.msra.mxu0 0.0
    %1938 = vmatprep.subr.mxu0 0.0
    %1939 = vmatpush1.msra.mxu0 0.0
    %1940 = vmatprep.subr.mxu0 0.0
    %1941 = vmatpush1.msra.mxu0 0.0
    %1942 = vmatprep.subr.mxu0 0.0
    %1943 = vmatpush1.msra.mxu0 0.0
    %1944 = vmatprep.subr.mxu0 0.0
    %1945 = vmatpush1.msra.mxu0 0.0
    %1946 = vmatprep.subr.mxu0 0.0
    %1947 = vmatpush1.msra.mxu0 0.0
    %1948 = vmatprep.subr.mxu0 0.0
    %1949 = vmatpush1.msra.mxu0 0.0
    %1950 = vmatprep.subr.mxu0 0.0
    %1951 = vmatpush1.msra.mxu0 0.0
    %1952 = vmatprep.subr.mxu0 0.0
    %1953 = vmatpush1.msra.mxu0 0.0
    %1954 = vmatprep.subr.mxu0 0.0
    %1955 = vmatpush1.msra.mxu0 0.0
    %1956 = vmatprep.subr.mxu0 0.0
    %1957 = vmatpush1.msra.mxu0 0.0
    %1958 = vmatprep.subr.mxu0 0.0
    %1959 = vmatpush1.msra.mxu0 0.0
    %1960 = vmatprep.subr.mxu0 0.0
    %1961 = vmatpush1.msra.mxu0 0.0
    %1962 = vmatprep.subr.mxu0 0.0
    %1963 = vmatpush1.msra.mxu0 0.0
    %1964 = vmatprep.subr.mxu0 0.0
    %1965 = vmatpush1.msra.mxu0 0.0
    %1966 = vmatprep.subr.mxu0 0.0
    %1967 = vmatpush1.msra.mxu0 0.0
    %1968 = vmatprep.subr.mxu0 0.0
    %1969 = vmatpush1.msra.mxu0 0.0
    %1970 = vmatprep.subr.mxu0 0.0
    %1971 = vmatpush1.msra.mxu0 0.0
    %1972 = vmatprep.subr.mxu0 0.0
    %1973 = vmatpush1.msra.mxu0 0.0
    %1974 = vmatprep.subr.mxu0 0.0
    %1975 = vmatpush1.msra.mxu0 0.0
    %1976 = vmatprep.subr.mxu0 0.0
    %1977 = vmatpush1.msra.mxu0 0.0
    %1978 = vmatprep.subr.mxu0 0.0
    %1979 = vmatpush1.msra.mxu0 0.0
    %1980 = vmatprep.subr.mxu0 0.0
    %1981 = vmatpush1.msra.mxu0 0.0
    %1982 = vmatprep.subr.mxu0 0.0
    %1983 = vmatpush1.msra.mxu0 0.0
    %1984 = vmatprep.subr.mxu0 0.0
    %1985 = vmatpush1.msra.mxu0 0.0
    %1986 = vmatprep.subr.mxu0 0.0
    %1987 = vmatpush1.msra.mxu0 0.0
    %1988 = vmatprep.subr.mxu0 0.0
    %1989 = vmatpush1.msra.mxu0 0.0
    %1990 = vmatprep.subr.mxu0 0.0
    %1991 = vmatpush1.msra.mxu0 0.0
    %1992 = vmatprep.mubr.f32.mxu0 0.0
    %1993 = vmatmul.mubr.f32.gmra.mrb[0].mxu0 %v1926
    %v1994 = vpop.f32.mrb[0].mxu0
    %v1995 = vadd.f32 0.0, %v1994
    %v1996 = vpop.f32.mrb[0].mxu0
    %1997 = vdwg.mxu0
    %vm1998 = vcmask 1024
    %1999 = vst.msk [vmem:[%s25] sm:$0x3] %vm1998, %v1995
    // Predicated region
    $region146: #{wdc_forward.1} parent=1 // pred_check
      _
    $region147: #{wdc_forward.1} parent=1 // pred_check_branch
      %2001 = sbr.rel (0) target = $region149
    $region148: #{wdc_forward.1} parent=1 // pred_region
      _
    $region149: #{wdc_forward.1} parent=1 // pred_fallthru
      _
    // Predicated region
    $region150: #{wdc_forward.1} parent=1 // pred_check
      _
    $region151: #{wdc_forward.1} parent=1 // pred_check_branch
      %2003 = sbr.rel (0) target = $region153
    $region152: #{wdc_forward.1} parent=1 // pred_region
      _
    $region153: #{wdc_forward.1} parent=1 // pred_fallthru
      _
    %2004 = vsyncpa [#allocation3], 1
    %2005 = vsyncpa [#allocation5], 1
    %2006 = vsyncpa [#allocation8], 1
    %2007 = vsyncpa [#allocation11], 1
    %2008 = vsyncpa [#allocation14], 1
    %2009 = vsyncpa [#allocation17], 1

</llo_original>
